<compile_context>
chip_gen: v6e
topology: v6e:2x2x1
jax: 0.10.0
libtpu: 0.0.40
codegen_flags: <defaults>
</compile_context>

<pallas_src>
import math

import jax
import jax.numpy as jnp
from jax.experimental import pallas as pl
from jax.experimental.pallas import tpu as pltpu

NLAYERS = 8
CMAX = 32      # max channel width in the chain; all layers padded to this
OUT_C = 10     # real output channels of conv8
OUT_PAD = 16   # padded output channels (multiple of 8 -> unmasked store)


def _sigmoid(z):
    # Exact sigmoid via a single EUP tanh; cheaper than exp + full-precision
    # divide on every one of the 8 serial layer stages.
    return 0.5 * jnp.tanh(0.5 * z) + 0.5


def _mlp_chain_kernel(x_ref, w_ref, b_ref, o_ref):
    # x_ref: (N, CMAX, tile_hw)   w_ref: (8, 32, 32)   b_ref: (8, 32, 1)
    # o_ref: (N, OUT_PAD, tile_hw)
    nb, _, tile = x_ref.shape
    out_c = o_ref.shape[1]

    # Build >= 2 independent activation chains: one per batch element; if only
    # one batch is present, split the lane tile in half.  The layer loop below
    # is statically unrolled, so the scheduler can interleave "layer l of
    # chain A" with "layer l of chain B" and hide per-layer latency.
    n_split = 2 if (nb == 1 and tile % 256 == 0) else 1
    half = tile // n_split

    chains = []
    for b in range(nb):
        for s in range(n_split):
            chains.append(x_ref[b, :, pl.ds(s * half, half)])  # (CMAX, half)

    for l in range(NLAYERS):
        w = w_ref[l]        # (32, 32) -- padded columns are exactly zero
        bias = b_ref[l]     # (32, 1)
        chains = [
            _sigmoid(jnp.dot(w, h, preferred_element_type=jnp.float32) + bias)
            for h in chains
        ]

    idx = 0
    for b in range(nb):
        for s in range(n_split):
            o_ref[b, :, pl.ds(s * half, half)] = (
                chains[idx][:out_c, :].astype(o_ref.dtype))
            idx += 1


def _tensorcores_per_chip():
    # v7x has 2 TensorCores per chip (shard spatial tiles across them);
    # v5e / v6e have 1 (minimize grid-step count instead).
    try:
        kind = jax.devices()[0].device_kind.lower()
    except Exception:
        return 1
    return 2 if "7" in kind else 1


def model_forward(x_nchw, w_packed, b_packed, *, tile_hw=None):
    N, C, H, W = x_nchw.shape
    HW = H * W

    if tile_hw is None:
        n_cores = _tensorcores_per_chip()
        if n_cores > 1 and HW % (128 * n_cores) == 0:
            tile_hw = HW // n_cores      # one lane-dense tile per TensorCore
        else:
            tile_hw = HW                 # single grid step on single-TC chips
        if tile_hw > 8192 and tile_hw % 8192 == 0:
            tile_hw = 8192               # amortize ~0.35us/step; VMEM never binds here
    # TODO(synk): pad/mask a ragged last tile for H*W not a multiple of 128.
    assert tile_hw % 128 == 0 and HW % tile_hw == 0, (HW, tile_hw)

    # NCHW viewed as (N, C, H*W); zero-pad channels to CMAX so layer 0 uses the
    # full (32, 32) weight like every other layer (padded weight columns are
    # zero, so the padding is inert).
    x = jnp.pad(x_nchw.reshape(N, C, HW), ((0, 0), (0, CMAX - C), (0, 0)))

    grid = (HW // tile_hw,)
    out_pad = pl.pallas_call(
        _mlp_chain_kernel,
        out_shape=jax.ShapeDtypeStruct((N, OUT_PAD, HW), jnp.float32),
        grid_spec=pltpu.PrefetchScalarGridSpec(
            num_scalar_prefetch=0,
            grid=grid,
            in_specs=[
                pl.BlockSpec((N, CMAX, tile_hw), lambda t: (0, 0, t)),
                # 33 KB of constants: keep whole-array resident in VMEM,
                # no per-step pipeline bookkeeping.
                pl.BlockSpec(memory_space=pltpu.MemorySpace.VMEM),
                pl.BlockSpec(memory_space=pltpu.MemorySpace.VMEM),
            ],
            out_specs=pl.BlockSpec((N, OUT_PAD, tile_hw), lambda t: (0, 0, t)),
        ),
        compiler_params=pltpu.CompilerParams(
            dimension_semantics=("parallel",)),
    )(x, w_packed, b_packed)

    # Drop the padded output channels; pure reshape, no transpose.
    return out_pad[:, :OUT_C, :].reshape(N, OUT_C, H, W)


def _init_conv_params(key, c_in, c_out):
    # PyTorch Conv2d default init for a 1x1 kernel:
    # kaiming_uniform(a=sqrt(5)) -> bound = 1/sqrt(fan_in); bias ~ U(+-bound).
    kw, kb = jax.random.split(key)
    bound = math.sqrt(1.0 / c_in)
    w = jax.random.uniform(kw, (c_out, c_in), jnp.float32, -bound, bound)
    b = jax.random.uniform(kb, (c_out,), jnp.float32, -bound, bound)
    return w, b


def pack_params(params):
    # NOTE: correctness of the uniform (32, 32) in-kernel loop relies on the
    # padded weight columns / bias rows being EXACTLY zero (zeros annihilate
    # the sigmoid(0)=0.5 garbage produced in padded activation rows).
    w_packed = jnp.zeros((NLAYERS, CMAX, CMAX), jnp.float32)
    b_packed = jnp.zeros((NLAYERS, CMAX, 1), jnp.float32)
    for l, (w, b) in enumerate(params):
        co, ci = w.shape
        w_packed = w_packed.at[l, :co, :ci].set(w)
        b_packed = b_packed.at[l, :co, 0].set(b)
    return w_packed, b_packed


def reference_forward(x_nchw, params):
    # Pure-JAX reference of the PyTorch forward (1x1 convs == channel matmuls;
    # torch.mul(v, 1.0) is an identity).
    N, C, H, W = x_nchw.shape
    h = x_nchw.reshape(N, C, H * W)
    for w, b in params:                              # w: (Cout, Cin), b: (Cout,)
        h = jax.nn.sigmoid(jnp.einsum('oc,ncp->nop', w, h) + b[None, :, None])
    return h.reshape(N, -1, H, W)


if __name__ == "__main__":
    key = jax.random.PRNGKey(0)
    keys = jax.random.split(key, 9)

    # Channel chain of the 8 1x1 convs: 5->32->5->32->5->16->4->32->10.
    chain = [(5, 32), (32, 5), (5, 32), (32, 5),
             (5, 16), (16, 4), (4, 32), (32, 10)]
    params = [_init_conv_params(keys[i], ci, co) for i, (ci, co) in enumerate(chain)]
    w_packed, b_packed = pack_params(params)

    # Small input consistent with the module: N=2, C=5, H=W=16.
    x = jax.random.normal(keys[8], (2, 5, 16, 16), dtype=jnp.float32)

    out = jax.block_until_ready(model_forward(x, w_packed, b_packed))

    ref = reference_forward(x, params)
    assert out.shape == (2, 10, 16, 16), out.shape
    assert jnp.allclose(out, ref, atol=1e-5, rtol=1e-5), "mismatch vs reference"

    print("KERNEL_OK")
</pallas_src>

<mosaic_0001>
module attributes {stable_mosaic.version = 11 : i64} {
  func.func @_mlp_chain_kernel(%arg0: i32, %arg1: memref<2x32x256xf32, #tpu.memory_space<vmem>>, %arg2: memref<8x32x32xf32, #tpu.memory_space<vmem>>, %arg3: memref<8x32x1xf32, #tpu.memory_space<vmem>>, %arg4: memref<2x16x256xf32, #tpu.memory_space<vmem>>) attributes {dimension_semantics = [#tpu.dimension_semantics<parallel>], iteration_bounds = array<i64: 1>, scalar_prefetch = 0 : i64, scratch_operands = 0 : i64, tpu.core_type = #tpu.core_type<tc>, window_params = [{transform_indices = @transform_0, window_bounds = array<i64: 2, 32, 256>}, {pipeline_mode = #tpu.pipeline_mode<synchronous>, transform_indices = @transform_1, window_bounds = array<i64: 8, 32, 32>}, {pipeline_mode = #tpu.pipeline_mode<synchronous>, transform_indices = @transform_2, window_bounds = array<i64: 8, 32, 1>}, {transform_indices = @transform_3, window_bounds = array<i64: 2, 16, 256>}]} {
    %c0 = arith.constant 0 : index
    %c0_0 = arith.constant 0 : index
    %c0_1 = arith.constant 0 : index
    %0 = vector.load %arg1[%c0, %c0_0, %c0_1] : memref<2x32x256xf32, #tpu.memory_space<vmem>>, vector<1x32x256xf32>
    %1 = vector.shape_cast %0 : vector<1x32x256xf32> to vector<32x256xf32>
    %c1 = arith.constant 1 : index
    %c0_2 = arith.constant 0 : index
    %c0_3 = arith.constant 0 : index
    %2 = vector.load %arg1[%c1, %c0_2, %c0_3] : memref<2x32x256xf32, #tpu.memory_space<vmem>>, vector<1x32x256xf32>
    %3 = vector.shape_cast %2 : vector<1x32x256xf32> to vector<32x256xf32>
    %c0_4 = arith.constant 0 : index
    %c0_5 = arith.constant 0 : index
    %c0_6 = arith.constant 0 : index
    %4 = vector.load %arg2[%c0_4, %c0_5, %c0_6] : memref<8x32x32xf32, #tpu.memory_space<vmem>>, vector<1x32x32xf32>
    %5 = vector.shape_cast %4 : vector<1x32x32xf32> to vector<32x32xf32>
    %c0_7 = arith.constant 0 : index
    %c0_8 = arith.constant 0 : index
    %c0_9 = arith.constant 0 : index
    %6 = vector.load %arg3[%c0_7, %c0_8, %c0_9] : memref<8x32x1xf32, #tpu.memory_space<vmem>>, vector<1x32x1xf32>
    %7 = vector.shape_cast %6 : vector<1x32x1xf32> to vector<32x1xf32>
    %cst = arith.constant dense<0.000000e+00> : vector<32x256xf32>
    %8 = tpu.matmul %5, %1, %cst {dimension_numbers = #tpu.dot_dimension_numbers<[1], [0], [0], [1], [0, 0, 1, 1], [], []>} : vector<32x32xf32>, vector<32x256xf32>, vector<32x256xf32> -> vector<32x256xf32>
    %9 = vector.broadcast %7 : vector<32x1xf32> to vector<32x256xf32>
    %10 = arith.addf %8, %9 : vector<32x256xf32>
    %cst_10 = arith.constant 5.000000e-01 : f32
    %11 = vector.broadcast %cst_10 : f32 to vector<32x256xf32>
    %12 = arith.mulf %11, %10 : vector<32x256xf32>
    %13 = math.tanh %12 : vector<32x256xf32>
    %cst_11 = arith.constant 5.000000e-01 : f32
    %14 = vector.broadcast %cst_11 : f32 to vector<32x256xf32>
    %15 = arith.mulf %14, %13 : vector<32x256xf32>
    %cst_12 = arith.constant 5.000000e-01 : f32
    %16 = vector.broadcast %cst_12 : f32 to vector<32x256xf32>
    %17 = arith.addf %15, %16 : vector<32x256xf32>
    %cst_13 = arith.constant dense<0.000000e+00> : vector<32x256xf32>
    %18 = tpu.matmul %5, %3, %cst_13 {dimension_numbers = #tpu.dot_dimension_numbers<[1], [0], [0], [1], [0, 0, 1, 1], [], []>} : vector<32x32xf32>, vector<32x256xf32>, vector<32x256xf32> -> vector<32x256xf32>
    %19 = vector.broadcast %7 : vector<32x1xf32> to vector<32x256xf32>
    %20 = arith.addf %18, %19 : vector<32x256xf32>
    %cst_14 = arith.constant 5.000000e-01 : f32
    %21 = vector.broadcast %cst_14 : f32 to vector<32x256xf32>
    %22 = arith.mulf %21, %20 : vector<32x256xf32>
    %23 = math.tanh %22 : vector<32x256xf32>
    %cst_15 = arith.constant 5.000000e-01 : f32
    %24 = vector.broadcast %cst_15 : f32 to vector<32x256xf32>
    %25 = arith.mulf %24, %23 : vector<32x256xf32>
    %cst_16 = arith.constant 5.000000e-01 : f32
    %26 = vector.broadcast %cst_16 : f32 to vector<32x256xf32>
    %27 = arith.addf %25, %26 : vector<32x256xf32>
    %c1_17 = arith.constant 1 : index
    %c0_18 = arith.constant 0 : index
    %c0_19 = arith.constant 0 : index
    %28 = vector.load %arg2[%c1_17, %c0_18, %c0_19] : memref<8x32x32xf32, #tpu.memory_space<vmem>>, vector<1x32x32xf32>
    %29 = vector.shape_cast %28 : vector<1x32x32xf32> to vector<32x32xf32>
    %c1_20 = arith.constant 1 : index
    %c0_21 = arith.constant 0 : index
    %c0_22 = arith.constant 0 : index
    %30 = vector.load %arg3[%c1_20, %c0_21, %c0_22] : memref<8x32x1xf32, #tpu.memory_space<vmem>>, vector<1x32x1xf32>
    %31 = vector.shape_cast %30 : vector<1x32x1xf32> to vector<32x1xf32>
    %cst_23 = arith.constant dense<0.000000e+00> : vector<32x256xf32>
    %32 = tpu.matmul %29, %17, %cst_23 {dimension_numbers = #tpu.dot_dimension_numbers<[1], [0], [0], [1], [0, 0, 1, 1], [], []>} : vector<32x32xf32>, vector<32x256xf32>, vector<32x256xf32> -> vector<32x256xf32>
    %33 = vector.broadcast %31 : vector<32x1xf32> to vector<32x256xf32>
    %34 = arith.addf %32, %33 : vector<32x256xf32>
    %cst_24 = arith.constant 5.000000e-01 : f32
    %35 = vector.broadcast %cst_24 : f32 to vector<32x256xf32>
    %36 = arith.mulf %35, %34 : vector<32x256xf32>
    %37 = math.tanh %36 : vector<32x256xf32>
    %cst_25 = arith.constant 5.000000e-01 : f32
    %38 = vector.broadcast %cst_25 : f32 to vector<32x256xf32>
    %39 = arith.mulf %38, %37 : vector<32x256xf32>
    %cst_26 = arith.constant 5.000000e-01 : f32
    %40 = vector.broadcast %cst_26 : f32 to vector<32x256xf32>
    %41 = arith.addf %39, %40 : vector<32x256xf32>
    %cst_27 = arith.constant dense<0.000000e+00> : vector<32x256xf32>
    %42 = tpu.matmul %29, %27, %cst_27 {dimension_numbers = #tpu.dot_dimension_numbers<[1], [0], [0], [1], [0, 0, 1, 1], [], []>} : vector<32x32xf32>, vector<32x256xf32>, vector<32x256xf32> -> vector<32x256xf32>
    %43 = vector.broadcast %31 : vector<32x1xf32> to vector<32x256xf32>
    %44 = arith.addf %42, %43 : vector<32x256xf32>
    %cst_28 = arith.constant 5.000000e-01 : f32
    %45 = vector.broadcast %cst_28 : f32 to vector<32x256xf32>
    %46 = arith.mulf %45, %44 : vector<32x256xf32>
    %47 = math.tanh %46 : vector<32x256xf32>
    %cst_29 = arith.constant 5.000000e-01 : f32
    %48 = vector.broadcast %cst_29 : f32 to vector<32x256xf32>
    %49 = arith.mulf %48, %47 : vector<32x256xf32>
    %cst_30 = arith.constant 5.000000e-01 : f32
    %50 = vector.broadcast %cst_30 : f32 to vector<32x256xf32>
    %51 = arith.addf %49, %50 : vector<32x256xf32>
    %c2 = arith.constant 2 : index
    %c0_31 = arith.constant 0 : index
    %c0_32 = arith.constant 0 : index
    %52 = vector.load %arg2[%c2, %c0_31, %c0_32] : memref<8x32x32xf32, #tpu.memory_space<vmem>>, vector<1x32x32xf32>
    %53 = vector.shape_cast %52 : vector<1x32x32xf32> to vector<32x32xf32>
    %c2_33 = arith.constant 2 : index
    %c0_34 = arith.constant 0 : index
    %c0_35 = arith.constant 0 : index
    %54 = vector.load %arg3[%c2_33, %c0_34, %c0_35] : memref<8x32x1xf32, #tpu.memory_space<vmem>>, vector<1x32x1xf32>
    %55 = vector.shape_cast %54 : vector<1x32x1xf32> to vector<32x1xf32>
    %cst_36 = arith.constant dense<0.000000e+00> : vector<32x256xf32>
    %56 = tpu.matmul %53, %41, %cst_36 {dimension_numbers = #tpu.dot_dimension_numbers<[1], [0], [0], [1], [0, 0, 1, 1], [], []>} : vector<32x32xf32>, vector<32x256xf32>, vector<32x256xf32> -> vector<32x256xf32>
    %57 = vector.broadcast %55 : vector<32x1xf32> to vector<32x256xf32>
    %58 = arith.addf %56, %57 : vector<32x256xf32>
    %cst_37 = arith.constant 5.000000e-01 : f32
    %59 = vector.broadcast %cst_37 : f32 to vector<32x256xf32>
    %60 = arith.mulf %59, %58 : vector<32x256xf32>
    %61 = math.tanh %60 : vector<32x256xf32>
    %cst_38 = arith.constant 5.000000e-01 : f32
    %62 = vector.broadcast %cst_38 : f32 to vector<32x256xf32>
    %63 = arith.mulf %62, %61 : vector<32x256xf32>
    %cst_39 = arith.constant 5.000000e-01 : f32
    %64 = vector.broadcast %cst_39 : f32 to vector<32x256xf32>
    %65 = arith.addf %63, %64 : vector<32x256xf32>
    %cst_40 = arith.constant dense<0.000000e+00> : vector<32x256xf32>
    %66 = tpu.matmul %53, %51, %cst_40 {dimension_numbers = #tpu.dot_dimension_numbers<[1], [0], [0], [1], [0, 0, 1, 1], [], []>} : vector<32x32xf32>, vector<32x256xf32>, vector<32x256xf32> -> vector<32x256xf32>
    %67 = vector.broadcast %55 : vector<32x1xf32> to vector<32x256xf32>
    %68 = arith.addf %66, %67 : vector<32x256xf32>
    %cst_41 = arith.constant 5.000000e-01 : f32
    %69 = vector.broadcast %cst_41 : f32 to vector<32x256xf32>
    %70 = arith.mulf %69, %68 : vector<32x256xf32>
    %71 = math.tanh %70 : vector<32x256xf32>
    %cst_42 = arith.constant 5.000000e-01 : f32
    %72 = vector.broadcast %cst_42 : f32 to vector<32x256xf32>
    %73 = arith.mulf %72, %71 : vector<32x256xf32>
    %cst_43 = arith.constant 5.000000e-01 : f32
    %74 = vector.broadcast %cst_43 : f32 to vector<32x256xf32>
    %75 = arith.addf %73, %74 : vector<32x256xf32>
    %c3 = arith.constant 3 : index
    %c0_44 = arith.constant 0 : index
    %c0_45 = arith.constant 0 : index
    %76 = vector.load %arg2[%c3, %c0_44, %c0_45] : memref<8x32x32xf32, #tpu.memory_space<vmem>>, vector<1x32x32xf32>
    %77 = vector.shape_cast %76 : vector<1x32x32xf32> to vector<32x32xf32>
    %c3_46 = arith.constant 3 : index
    %c0_47 = arith.constant 0 : index
    %c0_48 = arith.constant 0 : index
    %78 = vector.load %arg3[%c3_46, %c0_47, %c0_48] : memref<8x32x1xf32, #tpu.memory_space<vmem>>, vector<1x32x1xf32>
    %79 = vector.shape_cast %78 : vector<1x32x1xf32> to vector<32x1xf32>
    %cst_49 = arith.constant dense<0.000000e+00> : vector<32x256xf32>
    %80 = tpu.matmul %77, %65, %cst_49 {dimension_numbers = #tpu.dot_dimension_numbers<[1], [0], [0], [1], [0, 0, 1, 1], [], []>} : vector<32x32xf32>, vector<32x256xf32>, vector<32x256xf32> -> vector<32x256xf32>
    %81 = vector.broadcast %79 : vector<32x1xf32> to vector<32x256xf32>
    %82 = arith.addf %80, %81 : vector<32x256xf32>
    %cst_50 = arith.constant 5.000000e-01 : f32
    %83 = vector.broadcast %cst_50 : f32 to vector<32x256xf32>
    %84 = arith.mulf %83, %82 : vector<32x256xf32>
    %85 = math.tanh %84 : vector<32x256xf32>
    %cst_51 = arith.constant 5.000000e-01 : f32
    %86 = vector.broadcast %cst_51 : f32 to vector<32x256xf32>
    %87 = arith.mulf %86, %85 : vector<32x256xf32>
    %cst_52 = arith.constant 5.000000e-01 : f32
    %88 = vector.broadcast %cst_52 : f32 to vector<32x256xf32>
    %89 = arith.addf %87, %88 : vector<32x256xf32>
    %cst_53 = arith.constant dense<0.000000e+00> : vector<32x256xf32>
    %90 = tpu.matmul %77, %75, %cst_53 {dimension_numbers = #tpu.dot_dimension_numbers<[1], [0], [0], [1], [0, 0, 1, 1], [], []>} : vector<32x32xf32>, vector<32x256xf32>, vector<32x256xf32> -> vector<32x256xf32>
    %91 = vector.broadcast %79 : vector<32x1xf32> to vector<32x256xf32>
    %92 = arith.addf %90, %91 : vector<32x256xf32>
    %cst_54 = arith.constant 5.000000e-01 : f32
    %93 = vector.broadcast %cst_54 : f32 to vector<32x256xf32>
    %94 = arith.mulf %93, %92 : vector<32x256xf32>
    %95 = math.tanh %94 : vector<32x256xf32>
    %cst_55 = arith.constant 5.000000e-01 : f32
    %96 = vector.broadcast %cst_55 : f32 to vector<32x256xf32>
    %97 = arith.mulf %96, %95 : vector<32x256xf32>
    %cst_56 = arith.constant 5.000000e-01 : f32
    %98 = vector.broadcast %cst_56 : f32 to vector<32x256xf32>
    %99 = arith.addf %97, %98 : vector<32x256xf32>
    %c4 = arith.constant 4 : index
    %c0_57 = arith.constant 0 : index
    %c0_58 = arith.constant 0 : index
    %100 = vector.load %arg2[%c4, %c0_57, %c0_58] : memref<8x32x32xf32, #tpu.memory_space<vmem>>, vector<1x32x32xf32>
    %101 = vector.shape_cast %100 : vector<1x32x32xf32> to vector<32x32xf32>
    %c4_59 = arith.constant 4 : index
    %c0_60 = arith.constant 0 : index
    %c0_61 = arith.constant 0 : index
    %102 = vector.load %arg3[%c4_59, %c0_60, %c0_61] : memref<8x32x1xf32, #tpu.memory_space<vmem>>, vector<1x32x1xf32>
    %103 = vector.shape_cast %102 : vector<1x32x1xf32> to vector<32x1xf32>
    %cst_62 = arith.constant dense<0.000000e+00> : vector<32x256xf32>
    %104 = tpu.matmul %101, %89, %cst_62 {dimension_numbers = #tpu.dot_dimension_numbers<[1], [0], [0], [1], [0, 0, 1, 1], [], []>} : vector<32x32xf32>, vector<32x256xf32>, vector<32x256xf32> -> vector<32x256xf32>
    %105 = vector.broadcast %103 : vector<32x1xf32> to vector<32x256xf32>
    %106 = arith.addf %104, %105 : vector<32x256xf32>
    %cst_63 = arith.constant 5.000000e-01 : f32
    %107 = vector.broadcast %cst_63 : f32 to vector<32x256xf32>
    %108 = arith.mulf %107, %106 : vector<32x256xf32>
    %109 = math.tanh %108 : vector<32x256xf32>
    %cst_64 = arith.constant 5.000000e-01 : f32
    %110 = vector.broadcast %cst_64 : f32 to vector<32x256xf32>
    %111 = arith.mulf %110, %109 : vector<32x256xf32>
    %cst_65 = arith.constant 5.000000e-01 : f32
    %112 = vector.broadcast %cst_65 : f32 to vector<32x256xf32>
    %113 = arith.addf %111, %112 : vector<32x256xf32>
    %cst_66 = arith.constant dense<0.000000e+00> : vector<32x256xf32>
    %114 = tpu.matmul %101, %99, %cst_66 {dimension_numbers = #tpu.dot_dimension_numbers<[1], [0], [0], [1], [0, 0, 1, 1], [], []>} : vector<32x32xf32>, vector<32x256xf32>, vector<32x256xf32> -> vector<32x256xf32>
    %115 = vector.broadcast %103 : vector<32x1xf32> to vector<32x256xf32>
    %116 = arith.addf %114, %115 : vector<32x256xf32>
    %cst_67 = arith.constant 5.000000e-01 : f32
    %117 = vector.broadcast %cst_67 : f32 to vector<32x256xf32>
    %118 = arith.mulf %117, %116 : vector<32x256xf32>
    %119 = math.tanh %118 : vector<32x256xf32>
    %cst_68 = arith.constant 5.000000e-01 : f32
    %120 = vector.broadcast %cst_68 : f32 to vector<32x256xf32>
    %121 = arith.mulf %120, %119 : vector<32x256xf32>
    %cst_69 = arith.constant 5.000000e-01 : f32
    %122 = vector.broadcast %cst_69 : f32 to vector<32x256xf32>
    %123 = arith.addf %121, %122 : vector<32x256xf32>
    %c5 = arith.constant 5 : index
    %c0_70 = arith.constant 0 : index
    %c0_71 = arith.constant 0 : index
    %124 = vector.load %arg2[%c5, %c0_70, %c0_71] : memref<8x32x32xf32, #tpu.memory_space<vmem>>, vector<1x32x32xf32>
    %125 = vector.shape_cast %124 : vector<1x32x32xf32> to vector<32x32xf32>
    %c5_72 = arith.constant 5 : index
    %c0_73 = arith.constant 0 : index
    %c0_74 = arith.constant 0 : index
    %126 = vector.load %arg3[%c5_72, %c0_73, %c0_74] : memref<8x32x1xf32, #tpu.memory_space<vmem>>, vector<1x32x1xf32>
    %127 = vector.shape_cast %126 : vector<1x32x1xf32> to vector<32x1xf32>
    %cst_75 = arith.constant dense<0.000000e+00> : vector<32x256xf32>
    %128 = tpu.matmul %125, %113, %cst_75 {dimension_numbers = #tpu.dot_dimension_numbers<[1], [0], [0], [1], [0, 0, 1, 1], [], []>} : vector<32x32xf32>, vector<32x256xf32>, vector<32x256xf32> -> vector<32x256xf32>
    %129 = vector.broadcast %127 : vector<32x1xf32> to vector<32x256xf32>
    %130 = arith.addf %128, %129 : vector<32x256xf32>
    %cst_76 = arith.constant 5.000000e-01 : f32
    %131 = vector.broadcast %cst_76 : f32 to vector<32x256xf32>
    %132 = arith.mulf %131, %130 : vector<32x256xf32>
    %133 = math.tanh %132 : vector<32x256xf32>
    %cst_77 = arith.constant 5.000000e-01 : f32
    %134 = vector.broadcast %cst_77 : f32 to vector<32x256xf32>
    %135 = arith.mulf %134, %133 : vector<32x256xf32>
    %cst_78 = arith.constant 5.000000e-01 : f32
    %136 = vector.broadcast %cst_78 : f32 to vector<32x256xf32>
    %137 = arith.addf %135, %136 : vector<32x256xf32>
    %cst_79 = arith.constant dense<0.000000e+00> : vector<32x256xf32>
    %138 = tpu.matmul %125, %123, %cst_79 {dimension_numbers = #tpu.dot_dimension_numbers<[1], [0], [0], [1], [0, 0, 1, 1], [], []>} : vector<32x32xf32>, vector<32x256xf32>, vector<32x256xf32> -> vector<32x256xf32>
    %139 = vector.broadcast %127 : vector<32x1xf32> to vector<32x256xf32>
    %140 = arith.addf %138, %139 : vector<32x256xf32>
    %cst_80 = arith.constant 5.000000e-01 : f32
    %141 = vector.broadcast %cst_80 : f32 to vector<32x256xf32>
    %142 = arith.mulf %141, %140 : vector<32x256xf32>
    %143 = math.tanh %142 : vector<32x256xf32>
    %cst_81 = arith.constant 5.000000e-01 : f32
    %144 = vector.broadcast %cst_81 : f32 to vector<32x256xf32>
    %145 = arith.mulf %144, %143 : vector<32x256xf32>
    %cst_82 = arith.constant 5.000000e-01 : f32
    %146 = vector.broadcast %cst_82 : f32 to vector<32x256xf32>
    %147 = arith.addf %145, %146 : vector<32x256xf32>
    %c6 = arith.constant 6 : index
    %c0_83 = arith.constant 0 : index
    %c0_84 = arith.constant 0 : index
    %148 = vector.load %arg2[%c6, %c0_83, %c0_84] : memref<8x32x32xf32, #tpu.memory_space<vmem>>, vector<1x32x32xf32>
    %149 = vector.shape_cast %148 : vector<1x32x32xf32> to vector<32x32xf32>
    %c6_85 = arith.constant 6 : index
    %c0_86 = arith.constant 0 : index
    %c0_87 = arith.constant 0 : index
    %150 = vector.load %arg3[%c6_85, %c0_86, %c0_87] : memref<8x32x1xf32, #tpu.memory_space<vmem>>, vector<1x32x1xf32>
    %151 = vector.shape_cast %150 : vector<1x32x1xf32> to vector<32x1xf32>
    %cst_88 = arith.constant dense<0.000000e+00> : vector<32x256xf32>
    %152 = tpu.matmul %149, %137, %cst_88 {dimension_numbers = #tpu.dot_dimension_numbers<[1], [0], [0], [1], [0, 0, 1, 1], [], []>} : vector<32x32xf32>, vector<32x256xf32>, vector<32x256xf32> -> vector<32x256xf32>
    %153 = vector.broadcast %151 : vector<32x1xf32> to vector<32x256xf32>
    %154 = arith.addf %152, %153 : vector<32x256xf32>
    %cst_89 = arith.constant 5.000000e-01 : f32
    %155 = vector.broadcast %cst_89 : f32 to vector<32x256xf32>
    %156 = arith.mulf %155, %154 : vector<32x256xf32>
    %157 = math.tanh %156 : vector<32x256xf32>
    %cst_90 = arith.constant 5.000000e-01 : f32
    %158 = vector.broadcast %cst_90 : f32 to vector<32x256xf32>
    %159 = arith.mulf %158, %157 : vector<32x256xf32>
    %cst_91 = arith.constant 5.000000e-01 : f32
    %160 = vector.broadcast %cst_91 : f32 to vector<32x256xf32>
    %161 = arith.addf %159, %160 : vector<32x256xf32>
    %cst_92 = arith.constant dense<0.000000e+00> : vector<32x256xf32>
    %162 = tpu.matmul %149, %147, %cst_92 {dimension_numbers = #tpu.dot_dimension_numbers<[1], [0], [0], [1], [0, 0, 1, 1], [], []>} : vector<32x32xf32>, vector<32x256xf32>, vector<32x256xf32> -> vector<32x256xf32>
    %163 = vector.broadcast %151 : vector<32x1xf32> to vector<32x256xf32>
    %164 = arith.addf %162, %163 : vector<32x256xf32>
    %cst_93 = arith.constant 5.000000e-01 : f32
    %165 = vector.broadcast %cst_93 : f32 to vector<32x256xf32>
    %166 = arith.mulf %165, %164 : vector<32x256xf32>
    %167 = math.tanh %166 : vector<32x256xf32>
    %cst_94 = arith.constant 5.000000e-01 : f32
    %168 = vector.broadcast %cst_94 : f32 to vector<32x256xf32>
    %169 = arith.mulf %168, %167 : vector<32x256xf32>
    %cst_95 = arith.constant 5.000000e-01 : f32
    %170 = vector.broadcast %cst_95 : f32 to vector<32x256xf32>
    %171 = arith.addf %169, %170 : vector<32x256xf32>
    %c7 = arith.constant 7 : index
    %c0_96 = arith.constant 0 : index
    %c0_97 = arith.constant 0 : index
    %172 = vector.load %arg2[%c7, %c0_96, %c0_97] : memref<8x32x32xf32, #tpu.memory_space<vmem>>, vector<1x32x32xf32>
    %173 = vector.shape_cast %172 : vector<1x32x32xf32> to vector<32x32xf32>
    %c7_98 = arith.constant 7 : index
    %c0_99 = arith.constant 0 : index
    %c0_100 = arith.constant 0 : index
    %174 = vector.load %arg3[%c7_98, %c0_99, %c0_100] : memref<8x32x1xf32, #tpu.memory_space<vmem>>, vector<1x32x1xf32>
    %175 = vector.shape_cast %174 : vector<1x32x1xf32> to vector<32x1xf32>
    %cst_101 = arith.constant dense<0.000000e+00> : vector<32x256xf32>
    %176 = tpu.matmul %173, %161, %cst_101 {dimension_numbers = #tpu.dot_dimension_numbers<[1], [0], [0], [1], [0, 0, 1, 1], [], []>} : vector<32x32xf32>, vector<32x256xf32>, vector<32x256xf32> -> vector<32x256xf32>
    %177 = vector.broadcast %175 : vector<32x1xf32> to vector<32x256xf32>
    %178 = arith.addf %176, %177 : vector<32x256xf32>
    %cst_102 = arith.constant 5.000000e-01 : f32
    %179 = vector.broadcast %cst_102 : f32 to vector<32x256xf32>
    %180 = arith.mulf %179, %178 : vector<32x256xf32>
    %181 = math.tanh %180 : vector<32x256xf32>
    %cst_103 = arith.constant 5.000000e-01 : f32
    %182 = vector.broadcast %cst_103 : f32 to vector<32x256xf32>
    %183 = arith.mulf %182, %181 : vector<32x256xf32>
    %cst_104 = arith.constant 5.000000e-01 : f32
    %184 = vector.broadcast %cst_104 : f32 to vector<32x256xf32>
    %185 = arith.addf %183, %184 : vector<32x256xf32>
    %cst_105 = arith.constant dense<0.000000e+00> : vector<32x256xf32>
    %186 = tpu.matmul %173, %171, %cst_105 {dimension_numbers = #tpu.dot_dimension_numbers<[1], [0], [0], [1], [0, 0, 1, 1], [], []>} : vector<32x32xf32>, vector<32x256xf32>, vector<32x256xf32> -> vector<32x256xf32>
    %187 = vector.broadcast %175 : vector<32x1xf32> to vector<32x256xf32>
    %188 = arith.addf %186, %187 : vector<32x256xf32>
    %cst_106 = arith.constant 5.000000e-01 : f32
    %189 = vector.broadcast %cst_106 : f32 to vector<32x256xf32>
    %190 = arith.mulf %189, %188 : vector<32x256xf32>
    %191 = math.tanh %190 : vector<32x256xf32>
    %cst_107 = arith.constant 5.000000e-01 : f32
    %192 = vector.broadcast %cst_107 : f32 to vector<32x256xf32>
    %193 = arith.mulf %192, %191 : vector<32x256xf32>
    %cst_108 = arith.constant 5.000000e-01 : f32
    %194 = vector.broadcast %cst_108 : f32 to vector<32x256xf32>
    %195 = arith.addf %193, %194 : vector<32x256xf32>
    %196 = vector.extract_strided_slice %185 {offsets = [0, 0], sizes = [16, 256], strides = [1, 1]} : vector<32x256xf32> to vector<16x256xf32>
    %c0_109 = arith.constant 0 : index
    %c0_110 = arith.constant 0 : index
    %c0_111 = arith.constant 0 : index
    %197 = vector.load %arg4[%c0_109, %c0_110, %c0_111] : memref<2x16x256xf32, #tpu.memory_space<vmem>>, vector<1x16x256xf32>
    %198 = vector.shape_cast %197 : vector<1x16x256xf32> to vector<16x256xf32>
    %199 = vector.shape_cast %196 : vector<16x256xf32> to vector<1x16x256xf32>
    tpu.vector_store %arg4[%c0_109, %c0_110, %c0_111], %199 {strides = array<i32>} : memref<2x16x256xf32, #tpu.memory_space<vmem>>, vector<1x16x256xf32>,
    %200 = vector.extract_strided_slice %195 {offsets = [0, 0], sizes = [16, 256], strides = [1, 1]} : vector<32x256xf32> to vector<16x256xf32>
    %c1_112 = arith.constant 1 : index
    %c0_113 = arith.constant 0 : index
    %c0_114 = arith.constant 0 : index
    %201 = vector.load %arg4[%c1_112, %c0_113, %c0_114] : memref<2x16x256xf32, #tpu.memory_space<vmem>>, vector<1x16x256xf32>
    %202 = vector.shape_cast %201 : vector<1x16x256xf32> to vector<16x256xf32>
    %203 = vector.shape_cast %200 : vector<16x256xf32> to vector<1x16x256xf32>
    tpu.vector_store %arg4[%c1_112, %c0_113, %c0_114], %203 {strides = array<i32>} : memref<2x16x256xf32, #tpu.memory_space<vmem>>, vector<1x16x256xf32>,
    return
  }
  func.func @transform_0(%arg0: i32) -> (i32, i32, i32) {
    %c0_i32 = arith.constant 0 : i32
    %c0_i32_0 = arith.constant 0 : i32
    %c0_i32_1 = arith.constant 0 : i32
    return %c0_i32, %c0_i32_0, %arg0 : i32, i32, i32
  }
  func.func @transform_1(%arg0: i32) -> (i32, i32, i32) {
    %c0_i32 = arith.constant 0 : i32
    %c0_i32_0 = arith.constant 0 : i32
    %c0_i32_1 = arith.constant 0 : i32
    %c0_i32_2 = arith.constant 0 : i32
    return %c0_i32, %c0_i32_0, %c0_i32_1 : i32, i32, i32
  }
  func.func @transform_2(%arg0: i32) -> (i32, i32, i32) {
    %c0_i32 = arith.constant 0 : i32
    %c0_i32_0 = arith.constant 0 : i32
    %c0_i32_1 = arith.constant 0 : i32
    %c0_i32_2 = arith.constant 0 : i32
    return %c0_i32, %c0_i32_0, %c0_i32_1 : i32, i32, i32
  }
  func.func @transform_3(%arg0: i32) -> (i32, i32, i32) {
    %c0_i32 = arith.constant 0 : i32
    %c0_i32_0 = arith.constant 0 : i32
    %c0_i32_1 = arith.constant 0 : i32
    return %c0_i32, %c0_i32_0, %arg0 : i32, i32, i32
  }
}

</mosaic_0001>

<llo_original>
// kernel: tpu_custom_call.1
$region0: #{tpu_custom_call.1}
  #allocation0 [shape = 'u32[]', space=smem, size = 0x4, offset = 0x4, fixed_abs, tag = 'smem constant byte address 0x4 - core index']
  #allocation1 [shape = 'u32[144,128]{1,0:T(1,128)}', space=vmem, size = 0x12000, scoped, tag = 'internal scratch']
  %s0 = inlined_call_operand.hbm [shape: f32[2,32,256], index: 0, kind: input, shape index: {}]
  %s1 = inlined_call_operand.vmem [shape: f32[8,32,32], index: 1, kind: input, shape index: {}]
  %s2 = inlined_call_operand.vmem [shape: f32[8,32,1], index: 2, kind: input, shape index: {}]
  %s3 = inlined_call_operand.hbm [shape: f32[2,16,256], index: 3, kind: output, shape index: {}]
  %s4 = sld [smem:[#allocation0]]
  $region26: #{tpu_custom_call.1} parent=0
    _
  %s6 = ssub.s32 1, %s4
  %s7 = scalar_select 0, %s6, %s4
  $region1: #{tpu_custom_call.1} parent=0
    #allocation2 [shape = 'u8[65536]{0}', space=vmem, size = 0x10000, scoped, tag = 'input window, operand 0, single buffered']
    #allocation3 [shape = 's32[1]{0}', space=sflag, size = 0x4, scoped, tag = 'scoped memory for tpu_custom_call.1']
    #allocation4 [shape = 's32[1]{0}', space=sflag, size = 0x4, scoped, tag = 'scoped memory for tpu_custom_call.1']
    #allocation5 [shape = 'u8[32768]{0}', space=vmem, size = 0x8000, scoped, tag = 'output window, operand 0, single buffered']
    %8 = vsyncpa [#allocation3], 0
    %9 = vsyncpa [#allocation4], 0
    // Predicated region
    $region2: #{tpu_custom_call.1} parent=1 // pred_check
      _
    $region3: #{tpu_custom_call.1} parent=1 // pred_check_branch
      %11 = sbr.rel (0) target = $region5
    $region4: #{tpu_custom_call.1} parent=1 // pred_region
      %s13 = ssub.s32 2048, 2048
      %14 = vsyncadd [#allocation3], %s13
      %s15 = sshll.u32 [#allocation2], 4
      %s16 = int_to_ptr.vmem [resolvable:$true] %s15
      %21 = dma.hbm_to_vmem [thread:$0]  %s0, 2048, %s16, [#allocation3], 256, 256, 16
    $region5: #{tpu_custom_call.1} parent=1 // pred_fallthru
      _
    // Predicated region
    $region6: #{tpu_custom_call.1} parent=1 // pred_check
      _
    $region7: #{tpu_custom_call.1} parent=1 // pred_check_branch
      %23 = sbr.rel (0) target = $region9
    $region8: #{tpu_custom_call.1} parent=1 // pred_region
      _
    $region9: #{tpu_custom_call.1} parent=1 // pred_fallthru
      _
    // Predicated region
    $region10: #{tpu_custom_call.1} parent=1 // pred_check
      _
    $region11: #{tpu_custom_call.1} parent=1 // pred_check_branch
      %25 = sbr.rel (0) target = $region13
    $region12: #{tpu_custom_call.1} parent=1 // pred_region
      _
    $region13: #{tpu_custom_call.1} parent=1 // pred_fallthru
      _
    // Predicated region
    $region14: #{tpu_custom_call.1} parent=1 // pred_check
      _
    $region15: #{tpu_custom_call.1} parent=1 // pred_check_branch
      %27 = sbr.rel (0) target = $region17
    $region16: #{tpu_custom_call.1} parent=1 // pred_region
      %28 = dma.done [#allocation3], 2048
    $region17: #{tpu_custom_call.1} parent=1 // pred_fallthru
      _
    %v29 = vld [vmem:[#allocation2] sm:$0xff]
    %v30 = vld [vmem:[#allocation2 + $0x8] sm:$0xff]
    %v31 = vld [vmem:[#allocation2 + $0x10] sm:$0xff]
    %v32 = vld [vmem:[#allocation2 + $0x18] sm:$0xff]
    %v33 = vld [vmem:[#allocation2 + $0x20] sm:$0xff]
    %v34 = vld [vmem:[#allocation2 + $0x28] sm:$0xff]
    %v35 = vld [vmem:[#allocation2 + $0x30] sm:$0xff]
    %v36 = vld [vmem:[#allocation2 + $0x38] sm:$0xff]
    %s37 = scalar_lea.vmem [#allocation2], 64
    %v38 = vld [vmem:[%s37] sm:$0xff]
    %v39 = vld [vmem:[%s37 + $0x8] sm:$0xff]
    %v40 = vld [vmem:[%s37 + $0x10] sm:$0xff]
    %v41 = vld [vmem:[%s37 + $0x18] sm:$0xff]
    %v42 = vld [vmem:[%s37 + $0x20] sm:$0xff]
    %v43 = vld [vmem:[%s37 + $0x28] sm:$0xff]
    %v44 = vld [vmem:[%s37 + $0x30] sm:$0xff]
    %v45 = vld [vmem:[%s37 + $0x38] sm:$0xff]
    %v46 = vld [vmem:[%s1] sm:$0xff]
    %v47 = vld [vmem:[%s1 + $0x8] sm:$0xff]
    %v48 = vld [vmem:[%s1 + $0x10] sm:$0xff]
    %v49 = vld [vmem:[%s1 + $0x18] sm:$0xff]
    %v50 = vld [vmem:[%s2] sm:$0xff]
    %v51 = vld [vmem:[%s2 + $0x8] sm:$0xff]
    %v52 = vld [vmem:[%s2 + $0x10] sm:$0xff]
    %v53 = vld [vmem:[%s2 + $0x18] sm:$0xff]
    %55 = vset.pattern.permute.xlu0 0
    %56 = vperm.xlu0 %55, %v50
    %v57 = vpop.permute.xlu0 %56
    %60 = vset.pattern.permute.xlu0 0
    %61 = vperm.xlu0 %60, %v51
    %v62 = vpop.permute.xlu0 %61
    %65 = vset.pattern.permute.xlu0 0
    %66 = vperm.xlu0 %65, %v52
    %v67 = vpop.permute.xlu0 %66
    %70 = vset.pattern.permute.xlu0 0
    %71 = vperm.xlu0 %70, %v53
    %v72 = vpop.permute.xlu0 %71
    %vm74 = vcmask 261120
    %v76 = vsel %vm74, %v46, 0
    %v79 = vsel %vm74, %v47, 0
    %v82 = vsel %vm74, %v48, 0
    %v85 = vsel %vm74, %v49, 0
    %87 = vmatprep.subr.mxu0 0.0
    %88 = vmatpush1.msra.mxu0 0.0
    %89 = vmatprep.subr.mxu0 0.0
    %90 = vmatpush1.msra.mxu0 0.0
    %91 = vmatprep.subr.mxu0 0.0
    %92 = vmatpush1.msra.mxu0 0.0
    %93 = vmatprep.subr.mxu0 0.0
    %94 = vmatpush1.msra.mxu0 0.0
    %95 = vmatprep.subr.mxu0 0.0
    %96 = vmatpush1.msra.mxu0 0.0
    %97 = vmatprep.subr.mxu0 0.0
    %98 = vmatpush1.msra.mxu0 0.0
    %99 = vmatprep.subr.mxu0 0.0
    %100 = vmatpush1.msra.mxu0 0.0
    %101 = vmatprep.subr.mxu0 0.0
    %102 = vmatpush1.msra.mxu0 0.0
    %103 = vmatprep.subr.mxu0 0.0
    %104 = vmatpush1.msra.mxu0 0.0
    %105 = vmatprep.subr.mxu0 0.0
    %106 = vmatpush1.msra.mxu0 0.0
    %107 = vmatprep.subr.mxu0 0.0
    %108 = vmatpush1.msra.mxu0 0.0
    %109 = vmatprep.subr.mxu0 0.0
    %110 = vmatpush1.msra.mxu0 0.0
    %111 = vmatprep.subr.mxu0 %v36
    %112 = vmatpush1.msra.mxu0 %v35
    %113 = vmatprep.subr.mxu0 %v34
    %114 = vmatpush1.msra.mxu0 %v33
    %115 = vmatprep.subr.mxu0 %v32
    %116 = vmatpush1.msra.mxu0 %v31
    %117 = vmatprep.subr.mxu0 %v30
    %118 = vmatpush1.msra.mxu0 %v29
    %119 = vmatprep.subr.mxu0 0.0
    %120 = vmatpush2.msra.mxu0 0.0
    %121 = vmatprep.subr.mxu0 0.0
    %122 = vmatpush2.msra.mxu0 0.0
    %123 = vmatprep.subr.mxu0 0.0
    %124 = vmatpush2.msra.mxu0 0.0
    %125 = vmatprep.subr.mxu0 0.0
    %126 = vmatpush2.msra.mxu0 0.0
    %127 = vmatprep.subr.mxu0 0.0
    %128 = vmatpush2.msra.mxu0 0.0
    %129 = vmatprep.subr.mxu0 0.0
    %130 = vmatpush2.msra.mxu0 0.0
    %131 = vmatprep.subr.mxu0 0.0
    %132 = vmatpush2.msra.mxu0 0.0
    %133 = vmatprep.subr.mxu0 0.0
    %134 = vmatpush2.msra.mxu0 0.0
    %135 = vmatprep.subr.mxu0 0.0
    %136 = vmatpush2.msra.mxu0 0.0
    %137 = vmatprep.subr.mxu0 0.0
    %138 = vmatpush2.msra.mxu0 0.0
    %139 = vmatprep.subr.mxu0 0.0
    %140 = vmatpush2.msra.mxu0 0.0
    %141 = vmatprep.subr.mxu0 0.0
    %142 = vmatpush2.msra.mxu0 0.0
    %143 = vmatprep.subr.mxu0 0.0
    %144 = vmatpush2.msra.mxu0 0.0
    %145 = vmatprep.subr.mxu0 0.0
    %146 = vmatpush2.msra.mxu0 0.0
    %147 = vmatprep.subr.mxu0 0.0
    %148 = vmatpush2.msra.mxu0 0.0
    %149 = vmatprep.subr.mxu0 0.0
    %150 = vmatpush2.msra.mxu0 0.0
    %151 = vmatprep.mubr.f32.mxu0 0.0
    %152 = vmatmul.mubr.f32.gmra.mxu0 %v76
    %v153 = vpop.f32.mrf.mxu0
    %v154 = vadd.f32 %v57, %v153
    %v155 = vpop.f32.mrf.mxu0
    %v156 = vadd.f32 %v57, %v155
    %157 = vmatprep.mubr.f32.mxu0 0.0
    %158 = vmatmul.mubr.f32.gmra.mxu0 %v79
    %v159 = vpop.f32.mrf.mxu0
    %v160 = vadd.f32 %v62, %v159
    %v161 = vpop.f32.mrf.mxu0
    %v162 = vadd.f32 %v62, %v161
    %163 = vmatprep.mubr.f32.mxu0 0.0
    %164 = vmatmul.mubr.f32.gmra.mxu0 %v82
    %v165 = vpop.f32.mrf.mxu0
    %v166 = vadd.f32 %v67, %v165
    %v167 = vpop.f32.mrf.mxu0
    %v168 = vadd.f32 %v67, %v167
    %169 = vmatprep.mubr.f32.mxu0 0.0
    %170 = vmatmul.mubr.f32.gmra.mxu0 %v85
    %v171 = vpop.f32.mrf.mxu0
    %v172 = vadd.f32 %v72, %v171
    %v173 = vpop.f32.mrf.mxu0
    %v174 = vadd.f32 %v72, %v173
    %175 = vdwg.mxu0
    %v176 = vmul.f32 %v154, 0.5
    %v177 = vmul.f32 %v156, 0.5
    %v178 = vmul.f32 %v160, 0.5
    %v179 = vmul.f32 %v162, 0.5
    %v180 = vmul.f32 %v166, 0.5
    %v181 = vmul.f32 %v168, 0.5
    %v182 = vmul.f32 %v172, 0.5
    %v183 = vmul.f32 %v174, 0.5
    %v184 = vtanh.pop %v176
    %v185 = vtanh.pop %v177
    %v186 = vtanh.pop %v178
    %v187 = vtanh.pop %v179
    %v188 = vtanh.pop %v180
    %v189 = vtanh.pop %v181
    %v190 = vtanh.pop %v182
    %v191 = vtanh.pop %v183
    %v192 = vmul.f32 %v184, 0.5
    %v193 = vmul.f32 %v185, 0.5
    %v194 = vmul.f32 %v186, 0.5
    %v195 = vmul.f32 %v187, 0.5
    %v196 = vmul.f32 %v188, 0.5
    %v197 = vmul.f32 %v189, 0.5
    %v198 = vmul.f32 %v190, 0.5
    %v199 = vmul.f32 %v191, 0.5
    %v200 = vadd.f32 %v192, 0.5
    %v201 = vadd.f32 %v193, 0.5
    %v202 = vadd.f32 %v194, 0.5
    %v203 = vadd.f32 %v195, 0.5
    %v204 = vadd.f32 %v196, 0.5
    %v205 = vadd.f32 %v197, 0.5
    %v206 = vadd.f32 %v198, 0.5
    %v207 = vadd.f32 %v199, 0.5
    %208 = vmatprep.subr.mxu0 0.0
    %209 = vmatpush1.msra.mxu0 0.0
    %210 = vmatprep.subr.mxu0 0.0
    %211 = vmatpush1.msra.mxu0 0.0
    %212 = vmatprep.subr.mxu0 0.0
    %213 = vmatpush1.msra.mxu0 0.0
    %214 = vmatprep.subr.mxu0 0.0
    %215 = vmatpush1.msra.mxu0 0.0
    %216 = vmatprep.subr.mxu0 0.0
    %217 = vmatpush1.msra.mxu0 0.0
    %218 = vmatprep.subr.mxu0 0.0
    %219 = vmatpush1.msra.mxu0 0.0
    %220 = vmatprep.subr.mxu0 0.0
    %221 = vmatpush1.msra.mxu0 0.0
    %222 = vmatprep.subr.mxu0 0.0
    %223 = vmatpush1.msra.mxu0 0.0
    %224 = vmatprep.subr.mxu0 0.0
    %225 = vmatpush1.msra.mxu0 0.0
    %226 = vmatprep.subr.mxu0 0.0
    %227 = vmatpush1.msra.mxu0 0.0
    %228 = vmatprep.subr.mxu0 0.0
    %229 = vmatpush1.msra.mxu0 0.0
    %230 = vmatprep.subr.mxu0 0.0
    %231 = vmatpush1.msra.mxu0 0.0
    %232 = vmatprep.subr.mxu0 %v45
    %233 = vmatpush1.msra.mxu0 %v44
    %234 = vmatprep.subr.mxu0 %v43
    %235 = vmatpush1.msra.mxu0 %v42
    %236 = vmatprep.subr.mxu0 %v41
    %237 = vmatpush1.msra.mxu0 %v40
    %238 = vmatprep.subr.mxu0 %v39
    %239 = vmatpush1.msra.mxu0 %v38
    %240 = vmatprep.subr.mxu0 0.0
    %241 = vmatpush2.msra.mxu0 0.0
    %242 = vmatprep.subr.mxu0 0.0
    %243 = vmatpush2.msra.mxu0 0.0
    %244 = vmatprep.subr.mxu0 0.0
    %245 = vmatpush2.msra.mxu0 0.0
    %246 = vmatprep.subr.mxu0 0.0
    %247 = vmatpush2.msra.mxu0 0.0
    %248 = vmatprep.subr.mxu0 0.0
    %249 = vmatpush2.msra.mxu0 0.0
    %250 = vmatprep.subr.mxu0 0.0
    %251 = vmatpush2.msra.mxu0 0.0
    %252 = vmatprep.subr.mxu0 0.0
    %253 = vmatpush2.msra.mxu0 0.0
    %254 = vmatprep.subr.mxu0 0.0
    %255 = vmatpush2.msra.mxu0 0.0
    %256 = vmatprep.subr.mxu0 0.0
    %257 = vmatpush2.msra.mxu0 0.0
    %258 = vmatprep.subr.mxu0 0.0
    %259 = vmatpush2.msra.mxu0 0.0
    %260 = vmatprep.subr.mxu0 0.0
    %261 = vmatpush2.msra.mxu0 0.0
    %262 = vmatprep.subr.mxu0 0.0
    %263 = vmatpush2.msra.mxu0 0.0
    %264 = vmatprep.subr.mxu0 0.0
    %265 = vmatpush2.msra.mxu0 0.0
    %266 = vmatprep.subr.mxu0 0.0
    %267 = vmatpush2.msra.mxu0 0.0
    %268 = vmatprep.subr.mxu0 0.0
    %269 = vmatpush2.msra.mxu0 0.0
    %270 = vmatprep.subr.mxu0 0.0
    %271 = vmatpush2.msra.mxu0 0.0
    %272 = vmatprep.mubr.f32.mxu0 0.0
    %273 = vmatmul.mubr.f32.gmra.mxu0 %v76
    %v274 = vpop.f32.mrf.mxu0
    %v275 = vadd.f32 %v57, %v274
    %v276 = vpop.f32.mrf.mxu0
    %v277 = vadd.f32 %v57, %v276
    %278 = vmatprep.mubr.f32.mxu0 0.0
    %279 = vmatmul.mubr.f32.gmra.mxu0 %v79
    %v280 = vpop.f32.mrf.mxu0
    %v281 = vadd.f32 %v62, %v280
    %v282 = vpop.f32.mrf.mxu0
    %v283 = vadd.f32 %v62, %v282
    %284 = vmatprep.mubr.f32.mxu0 0.0
    %285 = vmatmul.mubr.f32.gmra.mxu0 %v82
    %v286 = vpop.f32.mrf.mxu0
    %v287 = vadd.f32 %v67, %v286
    %v288 = vpop.f32.mrf.mxu0
    %v289 = vadd.f32 %v67, %v288
    %290 = vmatprep.mubr.f32.mxu0 0.0
    %291 = vmatmul.mubr.f32.gmra.mxu0 %v85
    %v292 = vpop.f32.mrf.mxu0
    %v293 = vadd.f32 %v72, %v292
    %v294 = vpop.f32.mrf.mxu0
    %v295 = vadd.f32 %v72, %v294
    %296 = vdwg.mxu0
    %v297 = vmul.f32 %v275, 0.5
    %v298 = vmul.f32 %v277, 0.5
    %v299 = vmul.f32 %v281, 0.5
    %v300 = vmul.f32 %v283, 0.5
    %v301 = vmul.f32 %v287, 0.5
    %v302 = vmul.f32 %v289, 0.5
    %v303 = vmul.f32 %v293, 0.5
    %v304 = vmul.f32 %v295, 0.5
    %v305 = vtanh.pop %v297
    %v306 = vtanh.pop %v298
    %v307 = vtanh.pop %v299
    %v308 = vtanh.pop %v300
    %v309 = vtanh.pop %v301
    %v310 = vtanh.pop %v302
    %v311 = vtanh.pop %v303
    %v312 = vtanh.pop %v304
    %v313 = vmul.f32 %v305, 0.5
    %v314 = vmul.f32 %v306, 0.5
    %v315 = vmul.f32 %v307, 0.5
    %v316 = vmul.f32 %v308, 0.5
    %v317 = vmul.f32 %v309, 0.5
    %v318 = vmul.f32 %v310, 0.5
    %v319 = vmul.f32 %v311, 0.5
    %v320 = vmul.f32 %v312, 0.5
    %v321 = vadd.f32 %v313, 0.5
    %v322 = vadd.f32 %v314, 0.5
    %v323 = vadd.f32 %v315, 0.5
    %v324 = vadd.f32 %v316, 0.5
    %v325 = vadd.f32 %v317, 0.5
    %v326 = vadd.f32 %v318, 0.5
    %v327 = vadd.f32 %v319, 0.5
    %v328 = vadd.f32 %v320, 0.5
    %s329 = scalar_lea.vmem %s1, 32
    %v330 = vld [vmem:[%s329] sm:$0xff]
    %v331 = vld [vmem:[%s329 + $0x8] sm:$0xff]
    %v332 = vld [vmem:[%s329 + $0x10] sm:$0xff]
    %v333 = vld [vmem:[%s329 + $0x18] sm:$0xff]
    %s334 = scalar_lea.vmem %s2, 32
    %v335 = vld [vmem:[%s334] sm:$0xff]
    %v336 = vld [vmem:[%s334 + $0x8] sm:$0xff]
    %v337 = vld [vmem:[%s334 + $0x10] sm:$0xff]
    %v338 = vld [vmem:[%s334 + $0x18] sm:$0xff]
    %340 = vset.pattern.permute.xlu0 0
    %341 = vperm.xlu0 %340, %v335
    %v342 = vpop.permute.xlu0 %341
    %345 = vset.pattern.permute.xlu0 0
    %346 = vperm.xlu0 %345, %v336
    %v347 = vpop.permute.xlu0 %346
    %350 = vset.pattern.permute.xlu0 0
    %351 = vperm.xlu0 %350, %v337
    %v352 = vpop.permute.xlu0 %351
    %355 = vset.pattern.permute.xlu0 0
    %356 = vperm.xlu0 %355, %v338
    %v357 = vpop.permute.xlu0 %356
    %v360 = vsel %vm74, %v330, 0
    %v363 = vsel %vm74, %v331, 0
    %v366 = vsel %vm74, %v332, 0
    %v369 = vsel %vm74, %v333, 0
    %371 = vmatprep.subr.mxu0 0.0
    %372 = vmatpush1.msra.mxu0 0.0
    %373 = vmatprep.subr.mxu0 0.0
    %374 = vmatpush1.msra.mxu0 0.0
    %375 = vmatprep.subr.mxu0 0.0
    %376 = vmatpush1.msra.mxu0 0.0
    %377 = vmatprep.subr.mxu0 0.0
    %378 = vmatpush1.msra.mxu0 0.0
    %379 = vmatprep.subr.mxu0 0.0
    %380 = vmatpush1.msra.mxu0 0.0
    %381 = vmatprep.subr.mxu0 0.0
    %382 = vmatpush1.msra.mxu0 0.0
    %383 = vmatprep.subr.mxu0 0.0
    %384 = vmatpush1.msra.mxu0 0.0
    %385 = vmatprep.subr.mxu0 0.0
    %386 = vmatpush1.msra.mxu0 0.0
    %387 = vmatprep.subr.mxu0 0.0
    %388 = vmatpush1.msra.mxu0 0.0
    %389 = vmatprep.subr.mxu0 0.0
    %390 = vmatpush1.msra.mxu0 0.0
    %391 = vmatprep.subr.mxu0 0.0
    %392 = vmatpush1.msra.mxu0 0.0
    %393 = vmatprep.subr.mxu0 0.0
    %394 = vmatpush1.msra.mxu0 0.0
    %395 = vmatprep.subr.mxu0 %v207
    %396 = vmatpush1.msra.mxu0 %v206
    %397 = vmatprep.subr.mxu0 %v205
    %398 = vmatpush1.msra.mxu0 %v204
    %399 = vmatprep.subr.mxu0 %v203
    %400 = vmatpush1.msra.mxu0 %v202
    %401 = vmatprep.subr.mxu0 %v201
    %402 = vmatpush1.msra.mxu0 %v200
    %403 = vmatprep.subr.mxu0 0.0
    %404 = vmatpush2.msra.mxu0 0.0
    %405 = vmatprep.subr.mxu0 0.0
    %406 = vmatpush2.msra.mxu0 0.0
    %407 = vmatprep.subr.mxu0 0.0
    %408 = vmatpush2.msra.mxu0 0.0
    %409 = vmatprep.subr.mxu0 0.0
    %410 = vmatpush2.msra.mxu0 0.0
    %411 = vmatprep.subr.mxu0 0.0
    %412 = vmatpush2.msra.mxu0 0.0
    %413 = vmatprep.subr.mxu0 0.0
    %414 = vmatpush2.msra.mxu0 0.0
    %415 = vmatprep.subr.mxu0 0.0
    %416 = vmatpush2.msra.mxu0 0.0
    %417 = vmatprep.subr.mxu0 0.0
    %418 = vmatpush2.msra.mxu0 0.0
    %419 = vmatprep.subr.mxu0 0.0
    %420 = vmatpush2.msra.mxu0 0.0
    %421 = vmatprep.subr.mxu0 0.0
    %422 = vmatpush2.msra.mxu0 0.0
    %423 = vmatprep.subr.mxu0 0.0
    %424 = vmatpush2.msra.mxu0 0.0
    %425 = vmatprep.subr.mxu0 0.0
    %426 = vmatpush2.msra.mxu0 0.0
    %427 = vmatprep.subr.mxu0 0.0
    %428 = vmatpush2.msra.mxu0 0.0
    %429 = vmatprep.subr.mxu0 0.0
    %430 = vmatpush2.msra.mxu0 0.0
    %431 = vmatprep.subr.mxu0 0.0
    %432 = vmatpush2.msra.mxu0 0.0
    %433 = vmatprep.subr.mxu0 0.0
    %434 = vmatpush2.msra.mxu0 0.0
    %435 = vmatprep.mubr.f32.mxu0 0.0
    %436 = vmatmul.mubr.f32.gmra.mxu0 %v360
    %v437 = vpop.f32.mrf.mxu0
    %v438 = vadd.f32 %v342, %v437
    %v439 = vpop.f32.mrf.mxu0
    %v440 = vadd.f32 %v342, %v439
    %441 = vmatprep.mubr.f32.mxu0 0.0
    %442 = vmatmul.mubr.f32.gmra.mxu0 %v363
    %v443 = vpop.f32.mrf.mxu0
    %v444 = vadd.f32 %v347, %v443
    %v445 = vpop.f32.mrf.mxu0
    %v446 = vadd.f32 %v347, %v445
    %447 = vmatprep.mubr.f32.mxu0 0.0
    %448 = vmatmul.mubr.f32.gmra.mxu0 %v366
    %v449 = vpop.f32.mrf.mxu0
    %v450 = vadd.f32 %v352, %v449
    %v451 = vpop.f32.mrf.mxu0
    %v452 = vadd.f32 %v352, %v451
    %453 = vmatprep.mubr.f32.mxu0 0.0
    %454 = vmatmul.mubr.f32.gmra.mxu0 %v369
    %v455 = vpop.f32.mrf.mxu0
    %v456 = vadd.f32 %v357, %v455
    %v457 = vpop.f32.mrf.mxu0
    %v458 = vadd.f32 %v357, %v457
    %459 = vdwg.mxu0
    %v460 = vmul.f32 %v438, 0.5
    %v461 = vmul.f32 %v440, 0.5
    %v462 = vmul.f32 %v444, 0.5
    %v463 = vmul.f32 %v446, 0.5
    %v464 = vmul.f32 %v450, 0.5
    %v465 = vmul.f32 %v452, 0.5
    %v466 = vmul.f32 %v456, 0.5
    %v467 = vmul.f32 %v458, 0.5
    %v468 = vtanh.pop %v460
    %v469 = vtanh.pop %v461
    %v470 = vtanh.pop %v462
    %v471 = vtanh.pop %v463
    %v472 = vtanh.pop %v464
    %v473 = vtanh.pop %v465
    %v474 = vtanh.pop %v466
    %v475 = vtanh.pop %v467
    %v476 = vmul.f32 %v468, 0.5
    %v477 = vmul.f32 %v469, 0.5
    %v478 = vmul.f32 %v470, 0.5
    %v479 = vmul.f32 %v471, 0.5
    %v480 = vmul.f32 %v472, 0.5
    %v481 = vmul.f32 %v473, 0.5
    %v482 = vmul.f32 %v474, 0.5
    %v483 = vmul.f32 %v475, 0.5
    %v484 = vadd.f32 %v476, 0.5
    %v485 = vadd.f32 %v477, 0.5
    %v486 = vadd.f32 %v478, 0.5
    %v487 = vadd.f32 %v479, 0.5
    %v488 = vadd.f32 %v480, 0.5
    %v489 = vadd.f32 %v481, 0.5
    %v490 = vadd.f32 %v482, 0.5
    %v491 = vadd.f32 %v483, 0.5
    %492 = vmatprep.subr.mxu0 0.0
    %493 = vmatpush1.msra.mxu0 0.0
    %494 = vmatprep.subr.mxu0 0.0
    %495 = vmatpush1.msra.mxu0 0.0
    %496 = vmatprep.subr.mxu0 0.0
    %497 = vmatpush1.msra.mxu0 0.0
    %498 = vmatprep.subr.mxu0 0.0
    %499 = vmatpush1.msra.mxu0 0.0
    %500 = vmatprep.subr.mxu0 0.0
    %501 = vmatpush1.msra.mxu0 0.0
    %502 = vmatprep.subr.mxu0 0.0
    %503 = vmatpush1.msra.mxu0 0.0
    %504 = vmatprep.subr.mxu0 0.0
    %505 = vmatpush1.msra.mxu0 0.0
    %506 = vmatprep.subr.mxu0 0.0
    %507 = vmatpush1.msra.mxu0 0.0
    %508 = vmatprep.subr.mxu0 0.0
    %509 = vmatpush1.msra.mxu0 0.0
    %510 = vmatprep.subr.mxu0 0.0
    %511 = vmatpush1.msra.mxu0 0.0
    %512 = vmatprep.subr.mxu0 0.0
    %513 = vmatpush1.msra.mxu0 0.0
    %514 = vmatprep.subr.mxu0 0.0
    %515 = vmatpush1.msra.mxu0 0.0
    %516 = vmatprep.subr.mxu0 %v328
    %517 = vmatpush1.msra.mxu0 %v327
    %518 = vmatprep.subr.mxu0 %v326
    %519 = vmatpush1.msra.mxu0 %v325
    %520 = vmatprep.subr.mxu0 %v324
    %521 = vmatpush1.msra.mxu0 %v323
    %522 = vmatprep.subr.mxu0 %v322
    %523 = vmatpush1.msra.mxu0 %v321
    %524 = vmatprep.subr.mxu0 0.0
    %525 = vmatpush2.msra.mxu0 0.0
    %526 = vmatprep.subr.mxu0 0.0
    %527 = vmatpush2.msra.mxu0 0.0
    %528 = vmatprep.subr.mxu0 0.0
    %529 = vmatpush2.msra.mxu0 0.0
    %530 = vmatprep.subr.mxu0 0.0
    %531 = vmatpush2.msra.mxu0 0.0
    %532 = vmatprep.subr.mxu0 0.0
    %533 = vmatpush2.msra.mxu0 0.0
    %534 = vmatprep.subr.mxu0 0.0
    %535 = vmatpush2.msra.mxu0 0.0
    %536 = vmatprep.subr.mxu0 0.0
    %537 = vmatpush2.msra.mxu0 0.0
    %538 = vmatprep.subr.mxu0 0.0
    %539 = vmatpush2.msra.mxu0 0.0
    %540 = vmatprep.subr.mxu0 0.0
    %541 = vmatpush2.msra.mxu0 0.0
    %542 = vmatprep.subr.mxu0 0.0
    %543 = vmatpush2.msra.mxu0 0.0
    %544 = vmatprep.subr.mxu0 0.0
    %545 = vmatpush2.msra.mxu0 0.0
    %546 = vmatprep.subr.mxu0 0.0
    %547 = vmatpush2.msra.mxu0 0.0
    %548 = vmatprep.subr.mxu0 0.0
    %549 = vmatpush2.msra.mxu0 0.0
    %550 = vmatprep.subr.mxu0 0.0
    %551 = vmatpush2.msra.mxu0 0.0
    %552 = vmatprep.subr.mxu0 0.0
    %553 = vmatpush2.msra.mxu0 0.0
    %554 = vmatprep.subr.mxu0 0.0
    %555 = vmatpush2.msra.mxu0 0.0
    %556 = vmatprep.mubr.f32.mxu0 0.0
    %557 = vmatmul.mubr.f32.gmra.mxu0 %v360
    %v558 = vpop.f32.mrf.mxu0
    %v559 = vadd.f32 %v342, %v558
    %v560 = vpop.f32.mrf.mxu0
    %v561 = vadd.f32 %v342, %v560
    %562 = vmatprep.mubr.f32.mxu0 0.0
    %563 = vmatmul.mubr.f32.gmra.mxu0 %v363
    %v564 = vpop.f32.mrf.mxu0
    %v565 = vadd.f32 %v347, %v564
    %v566 = vpop.f32.mrf.mxu0
    %v567 = vadd.f32 %v347, %v566
    %568 = vmatprep.mubr.f32.mxu0 0.0
    %569 = vmatmul.mubr.f32.gmra.mxu0 %v366
    %v570 = vpop.f32.mrf.mxu0
    %v571 = vadd.f32 %v352, %v570
    %v572 = vpop.f32.mrf.mxu0
    %v573 = vadd.f32 %v352, %v572
    %574 = vmatprep.mubr.f32.mxu0 0.0
    %575 = vmatmul.mubr.f32.gmra.mxu0 %v369
    %v576 = vpop.f32.mrf.mxu0
    %v577 = vadd.f32 %v357, %v576
    %v578 = vpop.f32.mrf.mxu0
    %v579 = vadd.f32 %v357, %v578
    %580 = vdwg.mxu0
    %v581 = vmul.f32 %v559, 0.5
    %v582 = vmul.f32 %v561, 0.5
    %v583 = vmul.f32 %v565, 0.5
    %v584 = vmul.f32 %v567, 0.5
    %v585 = vmul.f32 %v571, 0.5
    %v586 = vmul.f32 %v573, 0.5
    %v587 = vmul.f32 %v577, 0.5
    %v588 = vmul.f32 %v579, 0.5
    %v589 = vtanh.pop %v581
    %v590 = vtanh.pop %v582
    %v591 = vtanh.pop %v583
    %v592 = vtanh.pop %v584
    %v593 = vtanh.pop %v585
    %v594 = vtanh.pop %v586
    %v595 = vtanh.pop %v587
    %v596 = vtanh.pop %v588
    %v597 = vmul.f32 %v589, 0.5
    %v598 = vmul.f32 %v590, 0.5
    %v599 = vmul.f32 %v591, 0.5
    %v600 = vmul.f32 %v592, 0.5
    %v601 = vmul.f32 %v593, 0.5
    %v602 = vmul.f32 %v594, 0.5
    %v603 = vmul.f32 %v595, 0.5
    %v604 = vmul.f32 %v596, 0.5
    %v605 = vadd.f32 %v597, 0.5
    %v606 = vadd.f32 %v598, 0.5
    %v607 = vadd.f32 %v599, 0.5
    %v608 = vadd.f32 %v600, 0.5
    %v609 = vadd.f32 %v601, 0.5
    %v610 = vadd.f32 %v602, 0.5
    %v611 = vadd.f32 %v603, 0.5
    %v612 = vadd.f32 %v604, 0.5
    %s613 = scalar_lea.vmem %s1, 64
    %v614 = vld [vmem:[%s613] sm:$0xff]
    %v615 = vld [vmem:[%s613 + $0x8] sm:$0xff]
    %v616 = vld [vmem:[%s613 + $0x10] sm:$0xff]
    %v617 = vld [vmem:[%s613 + $0x18] sm:$0xff]
    %s618 = scalar_lea.vmem %s2, 64
    %v619 = vld [vmem:[%s618] sm:$0xff]
    %v620 = vld [vmem:[%s618 + $0x8] sm:$0xff]
    %v621 = vld [vmem:[%s618 + $0x10] sm:$0xff]
    %v622 = vld [vmem:[%s618 + $0x18] sm:$0xff]
    %624 = vset.pattern.permute.xlu0 0
    %625 = vperm.xlu0 %624, %v619
    %v626 = vpop.permute.xlu0 %625
    %629 = vset.pattern.permute.xlu0 0
    %630 = vperm.xlu0 %629, %v620
    %v631 = vpop.permute.xlu0 %630
    %634 = vset.pattern.permute.xlu0 0
    %635 = vperm.xlu0 %634, %v621
    %v636 = vpop.permute.xlu0 %635
    %639 = vset.pattern.permute.xlu0 0
    %640 = vperm.xlu0 %639, %v622
    %v641 = vpop.permute.xlu0 %640
    %v644 = vsel %vm74, %v614, 0
    %v647 = vsel %vm74, %v615, 0
    %v650 = vsel %vm74, %v616, 0
    %v653 = vsel %vm74, %v617, 0
    %655 = vmatprep.subr.mxu0 0.0
    %656 = vmatpush1.msra.mxu0 0.0
    %657 = vmatprep.subr.mxu0 0.0
    %658 = vmatpush1.msra.mxu0 0.0
    %659 = vmatprep.subr.mxu0 0.0
    %660 = vmatpush1.msra.mxu0 0.0
    %661 = vmatprep.subr.mxu0 0.0
    %662 = vmatpush1.msra.mxu0 0.0
    %663 = vmatprep.subr.mxu0 0.0
    %664 = vmatpush1.msra.mxu0 0.0
    %665 = vmatprep.subr.mxu0 0.0
    %666 = vmatpush1.msra.mxu0 0.0
    %667 = vmatprep.subr.mxu0 0.0
    %668 = vmatpush1.msra.mxu0 0.0
    %669 = vmatprep.subr.mxu0 0.0
    %670 = vmatpush1.msra.mxu0 0.0
    %671 = vmatprep.subr.mxu0 0.0
    %672 = vmatpush1.msra.mxu0 0.0
    %673 = vmatprep.subr.mxu0 0.0
    %674 = vmatpush1.msra.mxu0 0.0
    %675 = vmatprep.subr.mxu0 0.0
    %676 = vmatpush1.msra.mxu0 0.0
    %677 = vmatprep.subr.mxu0 0.0
    %678 = vmatpush1.msra.mxu0 0.0
    %679 = vmatprep.subr.mxu0 %v491
    %680 = vmatpush1.msra.mxu0 %v490
    %681 = vmatprep.subr.mxu0 %v489
    %682 = vmatpush1.msra.mxu0 %v488
    %683 = vmatprep.subr.mxu0 %v487
    %684 = vmatpush1.msra.mxu0 %v486
    %685 = vmatprep.subr.mxu0 %v485
    %686 = vmatpush1.msra.mxu0 %v484
    %687 = vmatprep.subr.mxu0 0.0
    %688 = vmatpush2.msra.mxu0 0.0
    %689 = vmatprep.subr.mxu0 0.0
    %690 = vmatpush2.msra.mxu0 0.0
    %691 = vmatprep.subr.mxu0 0.0
    %692 = vmatpush2.msra.mxu0 0.0
    %693 = vmatprep.subr.mxu0 0.0
    %694 = vmatpush2.msra.mxu0 0.0
    %695 = vmatprep.subr.mxu0 0.0
    %696 = vmatpush2.msra.mxu0 0.0
    %697 = vmatprep.subr.mxu0 0.0
    %698 = vmatpush2.msra.mxu0 0.0
    %699 = vmatprep.subr.mxu0 0.0
    %700 = vmatpush2.msra.mxu0 0.0
    %701 = vmatprep.subr.mxu0 0.0
    %702 = vmatpush2.msra.mxu0 0.0
    %703 = vmatprep.subr.mxu0 0.0
    %704 = vmatpush2.msra.mxu0 0.0
    %705 = vmatprep.subr.mxu0 0.0
    %706 = vmatpush2.msra.mxu0 0.0
    %707 = vmatprep.subr.mxu0 0.0
    %708 = vmatpush2.msra.mxu0 0.0
    %709 = vmatprep.subr.mxu0 0.0
    %710 = vmatpush2.msra.mxu0 0.0
    %711 = vmatprep.subr.mxu0 0.0
    %712 = vmatpush2.msra.mxu0 0.0
    %713 = vmatprep.subr.mxu0 0.0
    %714 = vmatpush2.msra.mxu0 0.0
    %715 = vmatprep.subr.mxu0 0.0
    %716 = vmatpush2.msra.mxu0 0.0
    %717 = vmatprep.subr.mxu0 0.0
    %718 = vmatpush2.msra.mxu0 0.0
    %719 = vmatprep.mubr.f32.mxu0 0.0
    %720 = vmatmul.mubr.f32.gmra.mxu0 %v644
    %v721 = vpop.f32.mrf.mxu0
    %v722 = vadd.f32 %v626, %v721
    %v723 = vpop.f32.mrf.mxu0
    %v724 = vadd.f32 %v626, %v723
    %725 = vmatprep.mubr.f32.mxu0 0.0
    %726 = vmatmul.mubr.f32.gmra.mxu0 %v647
    %v727 = vpop.f32.mrf.mxu0
    %v728 = vadd.f32 %v631, %v727
    %v729 = vpop.f32.mrf.mxu0
    %v730 = vadd.f32 %v631, %v729
    %731 = vmatprep.mubr.f32.mxu0 0.0
    %732 = vmatmul.mubr.f32.gmra.mxu0 %v650
    %v733 = vpop.f32.mrf.mxu0
    %v734 = vadd.f32 %v636, %v733
    %v735 = vpop.f32.mrf.mxu0
    %v736 = vadd.f32 %v636, %v735
    %737 = vmatprep.mubr.f32.mxu0 0.0
    %738 = vmatmul.mubr.f32.gmra.mxu0 %v653
    %v739 = vpop.f32.mrf.mxu0
    %v740 = vadd.f32 %v641, %v739
    %v741 = vpop.f32.mrf.mxu0
    %v742 = vadd.f32 %v641, %v741
    %743 = vdwg.mxu0
    %v744 = vmul.f32 %v722, 0.5
    %v745 = vmul.f32 %v724, 0.5
    %v746 = vmul.f32 %v728, 0.5
    %v747 = vmul.f32 %v730, 0.5
    %v748 = vmul.f32 %v734, 0.5
    %v749 = vmul.f32 %v736, 0.5
    %v750 = vmul.f32 %v740, 0.5
    %v751 = vmul.f32 %v742, 0.5
    %v752 = vtanh.pop %v744
    %v753 = vtanh.pop %v745
    %v754 = vtanh.pop %v746
    %v755 = vtanh.pop %v747
    %v756 = vtanh.pop %v748
    %v757 = vtanh.pop %v749
    %v758 = vtanh.pop %v750
    %v759 = vtanh.pop %v751
    %v760 = vmul.f32 %v752, 0.5
    %v761 = vmul.f32 %v753, 0.5
    %v762 = vmul.f32 %v754, 0.5
    %v763 = vmul.f32 %v755, 0.5
    %v764 = vmul.f32 %v756, 0.5
    %v765 = vmul.f32 %v757, 0.5
    %v766 = vmul.f32 %v758, 0.5
    %v767 = vmul.f32 %v759, 0.5
    %v768 = vadd.f32 %v760, 0.5
    %v769 = vadd.f32 %v761, 0.5
    %v770 = vadd.f32 %v762, 0.5
    %v771 = vadd.f32 %v763, 0.5
    %v772 = vadd.f32 %v764, 0.5
    %v773 = vadd.f32 %v765, 0.5
    %v774 = vadd.f32 %v766, 0.5
    %v775 = vadd.f32 %v767, 0.5
    %776 = vmatprep.subr.mxu0 0.0
    %777 = vmatpush1.msra.mxu0 0.0
    %778 = vmatprep.subr.mxu0 0.0
    %779 = vmatpush1.msra.mxu0 0.0
    %780 = vmatprep.subr.mxu0 0.0
    %781 = vmatpush1.msra.mxu0 0.0
    %782 = vmatprep.subr.mxu0 0.0
    %783 = vmatpush1.msra.mxu0 0.0
    %784 = vmatprep.subr.mxu0 0.0
    %785 = vmatpush1.msra.mxu0 0.0
    %786 = vmatprep.subr.mxu0 0.0
    %787 = vmatpush1.msra.mxu0 0.0
    %788 = vmatprep.subr.mxu0 0.0
    %789 = vmatpush1.msra.mxu0 0.0
    %790 = vmatprep.subr.mxu0 0.0
    %791 = vmatpush1.msra.mxu0 0.0
    %792 = vmatprep.subr.mxu0 0.0
    %793 = vmatpush1.msra.mxu0 0.0
    %794 = vmatprep.subr.mxu0 0.0
    %795 = vmatpush1.msra.mxu0 0.0
    %796 = vmatprep.subr.mxu0 0.0
    %797 = vmatpush1.msra.mxu0 0.0
    %798 = vmatprep.subr.mxu0 0.0
    %799 = vmatpush1.msra.mxu0 0.0
    %800 = vmatprep.subr.mxu0 %v612
    %801 = vmatpush1.msra.mxu0 %v611
    %802 = vmatprep.subr.mxu0 %v610
    %803 = vmatpush1.msra.mxu0 %v609
    %804 = vmatprep.subr.mxu0 %v608
    %805 = vmatpush1.msra.mxu0 %v607
    %806 = vmatprep.subr.mxu0 %v606
    %807 = vmatpush1.msra.mxu0 %v605
    %808 = vmatprep.subr.mxu0 0.0
    %809 = vmatpush2.msra.mxu0 0.0
    %810 = vmatprep.subr.mxu0 0.0
    %811 = vmatpush2.msra.mxu0 0.0
    %812 = vmatprep.subr.mxu0 0.0
    %813 = vmatpush2.msra.mxu0 0.0
    %814 = vmatprep.subr.mxu0 0.0
    %815 = vmatpush2.msra.mxu0 0.0
    %816 = vmatprep.subr.mxu0 0.0
    %817 = vmatpush2.msra.mxu0 0.0
    %818 = vmatprep.subr.mxu0 0.0
    %819 = vmatpush2.msra.mxu0 0.0
    %820 = vmatprep.subr.mxu0 0.0
    %821 = vmatpush2.msra.mxu0 0.0
    %822 = vmatprep.subr.mxu0 0.0
    %823 = vmatpush2.msra.mxu0 0.0
    %824 = vmatprep.subr.mxu0 0.0
    %825 = vmatpush2.msra.mxu0 0.0
    %826 = vmatprep.subr.mxu0 0.0
    %827 = vmatpush2.msra.mxu0 0.0
    %828 = vmatprep.subr.mxu0 0.0
    %829 = vmatpush2.msra.mxu0 0.0
    %830 = vmatprep.subr.mxu0 0.0
    %831 = vmatpush2.msra.mxu0 0.0
    %832 = vmatprep.subr.mxu0 0.0
    %833 = vmatpush2.msra.mxu0 0.0
    %834 = vmatprep.subr.mxu0 0.0
    %835 = vmatpush2.msra.mxu0 0.0
    %836 = vmatprep.subr.mxu0 0.0
    %837 = vmatpush2.msra.mxu0 0.0
    %838 = vmatprep.subr.mxu0 0.0
    %839 = vmatpush2.msra.mxu0 0.0
    %840 = vmatprep.mubr.f32.mxu0 0.0
    %841 = vmatmul.mubr.f32.gmra.mxu0 %v644
    %v842 = vpop.f32.mrf.mxu0
    %v843 = vadd.f32 %v626, %v842
    %v844 = vpop.f32.mrf.mxu0
    %v845 = vadd.f32 %v626, %v844
    %846 = vmatprep.mubr.f32.mxu0 0.0
    %847 = vmatmul.mubr.f32.gmra.mxu0 %v647
    %v848 = vpop.f32.mrf.mxu0
    %v849 = vadd.f32 %v631, %v848
    %v850 = vpop.f32.mrf.mxu0
    %v851 = vadd.f32 %v631, %v850
    %852 = vmatprep.mubr.f32.mxu0 0.0
    %853 = vmatmul.mubr.f32.gmra.mxu0 %v650
    %v854 = vpop.f32.mrf.mxu0
    %v855 = vadd.f32 %v636, %v854
    %v856 = vpop.f32.mrf.mxu0
    %v857 = vadd.f32 %v636, %v856
    %858 = vmatprep.mubr.f32.mxu0 0.0
    %859 = vmatmul.mubr.f32.gmra.mxu0 %v653
    %v860 = vpop.f32.mrf.mxu0
    %v861 = vadd.f32 %v641, %v860
    %v862 = vpop.f32.mrf.mxu0
    %v863 = vadd.f32 %v641, %v862
    %864 = vdwg.mxu0
    %v865 = vmul.f32 %v843, 0.5
    %v866 = vmul.f32 %v845, 0.5
    %v867 = vmul.f32 %v849, 0.5
    %v868 = vmul.f32 %v851, 0.5
    %v869 = vmul.f32 %v855, 0.5
    %v870 = vmul.f32 %v857, 0.5
    %v871 = vmul.f32 %v861, 0.5
    %v872 = vmul.f32 %v863, 0.5
    %v873 = vtanh.pop %v865
    %v874 = vtanh.pop %v866
    %v875 = vtanh.pop %v867
    %v876 = vtanh.pop %v868
    %v877 = vtanh.pop %v869
    %v878 = vtanh.pop %v870
    %v879 = vtanh.pop %v871
    %v880 = vtanh.pop %v872
    %v881 = vmul.f32 %v873, 0.5
    %v882 = vmul.f32 %v874, 0.5
    %v883 = vmul.f32 %v875, 0.5
    %v884 = vmul.f32 %v876, 0.5
    %v885 = vmul.f32 %v877, 0.5
    %v886 = vmul.f32 %v878, 0.5
    %v887 = vmul.f32 %v879, 0.5
    %v888 = vmul.f32 %v880, 0.5
    %v889 = vadd.f32 %v881, 0.5
    %v890 = vadd.f32 %v882, 0.5
    %v891 = vadd.f32 %v883, 0.5
    %v892 = vadd.f32 %v884, 0.5
    %v893 = vadd.f32 %v885, 0.5
    %v894 = vadd.f32 %v886, 0.5
    %v895 = vadd.f32 %v887, 0.5
    %v896 = vadd.f32 %v888, 0.5
    %s897 = scalar_lea.vmem %s1, 96
    %v898 = vld [vmem:[%s897] sm:$0xff]
    %v899 = vld [vmem:[%s897 + $0x8] sm:$0xff]
    %v900 = vld [vmem:[%s897 + $0x10] sm:$0xff]
    %v901 = vld [vmem:[%s897 + $0x18] sm:$0xff]
    %s902 = scalar_lea.vmem %s2, 96
    %v903 = vld [vmem:[%s902] sm:$0xff]
    %v904 = vld [vmem:[%s902 + $0x8] sm:$0xff]
    %v905 = vld [vmem:[%s902 + $0x10] sm:$0xff]
    %v906 = vld [vmem:[%s902 + $0x18] sm:$0xff]
    %908 = vset.pattern.permute.xlu0 0
    %909 = vperm.xlu0 %908, %v903
    %v910 = vpop.permute.xlu0 %909
    %913 = vset.pattern.permute.xlu0 0
    %914 = vperm.xlu0 %913, %v904
    %v915 = vpop.permute.xlu0 %914
    %918 = vset.pattern.permute.xlu0 0
    %919 = vperm.xlu0 %918, %v905
    %v920 = vpop.permute.xlu0 %919
    %923 = vset.pattern.permute.xlu0 0
    %924 = vperm.xlu0 %923, %v906
    %v925 = vpop.permute.xlu0 %924
    %v928 = vsel %vm74, %v898, 0
    %v931 = vsel %vm74, %v899, 0
    %v934 = vsel %vm74, %v900, 0
    %v937 = vsel %vm74, %v901, 0
    %939 = vmatprep.subr.mxu0 0.0
    %940 = vmatpush1.msra.mxu0 0.0
    %941 = vmatprep.subr.mxu0 0.0
    %942 = vmatpush1.msra.mxu0 0.0
    %943 = vmatprep.subr.mxu0 0.0
    %944 = vmatpush1.msra.mxu0 0.0
    %945 = vmatprep.subr.mxu0 0.0
    %946 = vmatpush1.msra.mxu0 0.0
    %947 = vmatprep.subr.mxu0 0.0
    %948 = vmatpush1.msra.mxu0 0.0
    %949 = vmatprep.subr.mxu0 0.0
    %950 = vmatpush1.msra.mxu0 0.0
    %951 = vmatprep.subr.mxu0 0.0
    %952 = vmatpush1.msra.mxu0 0.0
    %953 = vmatprep.subr.mxu0 0.0
    %954 = vmatpush1.msra.mxu0 0.0
    %955 = vmatprep.subr.mxu0 0.0
    %956 = vmatpush1.msra.mxu0 0.0
    %957 = vmatprep.subr.mxu0 0.0
    %958 = vmatpush1.msra.mxu0 0.0
    %959 = vmatprep.subr.mxu0 0.0
    %960 = vmatpush1.msra.mxu0 0.0
    %961 = vmatprep.subr.mxu0 0.0
    %962 = vmatpush1.msra.mxu0 0.0
    %963 = vmatprep.subr.mxu0 %v775
    %964 = vmatpush1.msra.mxu0 %v774
    %965 = vmatprep.subr.mxu0 %v773
    %966 = vmatpush1.msra.mxu0 %v772
    %967 = vmatprep.subr.mxu0 %v771
    %968 = vmatpush1.msra.mxu0 %v770
    %969 = vmatprep.subr.mxu0 %v769
    %970 = vmatpush1.msra.mxu0 %v768
    %971 = vmatprep.subr.mxu0 0.0
    %972 = vmatpush2.msra.mxu0 0.0
    %973 = vmatprep.subr.mxu0 0.0
    %974 = vmatpush2.msra.mxu0 0.0
    %975 = vmatprep.subr.mxu0 0.0
    %976 = vmatpush2.msra.mxu0 0.0
    %977 = vmatprep.subr.mxu0 0.0
    %978 = vmatpush2.msra.mxu0 0.0
    %979 = vmatprep.subr.mxu0 0.0
    %980 = vmatpush2.msra.mxu0 0.0
    %981 = vmatprep.subr.mxu0 0.0
    %982 = vmatpush2.msra.mxu0 0.0
    %983 = vmatprep.subr.mxu0 0.0
    %984 = vmatpush2.msra.mxu0 0.0
    %985 = vmatprep.subr.mxu0 0.0
    %986 = vmatpush2.msra.mxu0 0.0
    %987 = vmatprep.subr.mxu0 0.0
    %988 = vmatpush2.msra.mxu0 0.0
    %989 = vmatprep.subr.mxu0 0.0
    %990 = vmatpush2.msra.mxu0 0.0
    %991 = vmatprep.subr.mxu0 0.0
    %992 = vmatpush2.msra.mxu0 0.0
    %993 = vmatprep.subr.mxu0 0.0
    %994 = vmatpush2.msra.mxu0 0.0
    %995 = vmatprep.subr.mxu0 0.0
    %996 = vmatpush2.msra.mxu0 0.0
    %997 = vmatprep.subr.mxu0 0.0
    %998 = vmatpush2.msra.mxu0 0.0
    %999 = vmatprep.subr.mxu0 0.0
    %1000 = vmatpush2.msra.mxu0 0.0
    %1001 = vmatprep.subr.mxu0 0.0
    %1002 = vmatpush2.msra.mxu0 0.0
    %1003 = vmatprep.mubr.f32.mxu0 0.0
    %1004 = vmatmul.mubr.f32.gmra.mxu0 %v928
    %v1005 = vpop.f32.mrf.mxu0
    %v1006 = vadd.f32 %v910, %v1005
    %v1007 = vpop.f32.mrf.mxu0
    %v1008 = vadd.f32 %v910, %v1007
    %1009 = vmatprep.mubr.f32.mxu0 0.0
    %1010 = vmatmul.mubr.f32.gmra.mxu0 %v931
    %v1011 = vpop.f32.mrf.mxu0
    %v1012 = vadd.f32 %v915, %v1011
    %v1013 = vpop.f32.mrf.mxu0
    %v1014 = vadd.f32 %v915, %v1013
    %1015 = vmatprep.mubr.f32.mxu0 0.0
    %1016 = vmatmul.mubr.f32.gmra.mxu0 %v934
    %v1017 = vpop.f32.mrf.mxu0
    %v1018 = vadd.f32 %v920, %v1017
    %v1019 = vpop.f32.mrf.mxu0
    %v1020 = vadd.f32 %v920, %v1019
    %1021 = vmatprep.mubr.f32.mxu0 0.0
    %1022 = vmatmul.mubr.f32.gmra.mxu0 %v937
    %v1023 = vpop.f32.mrf.mxu0
    %v1024 = vadd.f32 %v925, %v1023
    %v1025 = vpop.f32.mrf.mxu0
    %v1026 = vadd.f32 %v925, %v1025
    %1027 = vdwg.mxu0
    %v1028 = vmul.f32 %v1006, 0.5
    %v1029 = vmul.f32 %v1008, 0.5
    %v1030 = vmul.f32 %v1012, 0.5
    %v1031 = vmul.f32 %v1014, 0.5
    %v1032 = vmul.f32 %v1018, 0.5
    %v1033 = vmul.f32 %v1020, 0.5
    %v1034 = vmul.f32 %v1024, 0.5
    %v1035 = vmul.f32 %v1026, 0.5
    %v1036 = vtanh.pop %v1028
    %v1037 = vtanh.pop %v1029
    %v1038 = vtanh.pop %v1030
    %v1039 = vtanh.pop %v1031
    %v1040 = vtanh.pop %v1032
    %v1041 = vtanh.pop %v1033
    %v1042 = vtanh.pop %v1034
    %v1043 = vtanh.pop %v1035
    %v1044 = vmul.f32 %v1036, 0.5
    %v1045 = vmul.f32 %v1037, 0.5
    %v1046 = vmul.f32 %v1038, 0.5
    %v1047 = vmul.f32 %v1039, 0.5
    %v1048 = vmul.f32 %v1040, 0.5
    %v1049 = vmul.f32 %v1041, 0.5
    %v1050 = vmul.f32 %v1042, 0.5
    %v1051 = vmul.f32 %v1043, 0.5
    %v1052 = vadd.f32 %v1044, 0.5
    %v1053 = vadd.f32 %v1045, 0.5
    %v1054 = vadd.f32 %v1046, 0.5
    %v1055 = vadd.f32 %v1047, 0.5
    %v1056 = vadd.f32 %v1048, 0.5
    %v1057 = vadd.f32 %v1049, 0.5
    %v1058 = vadd.f32 %v1050, 0.5
    %v1059 = vadd.f32 %v1051, 0.5
    %1060 = vmatprep.subr.mxu0 0.0
    %1061 = vmatpush1.msra.mxu0 0.0
    %1062 = vmatprep.subr.mxu0 0.0
    %1063 = vmatpush1.msra.mxu0 0.0
    %1064 = vmatprep.subr.mxu0 0.0
    %1065 = vmatpush1.msra.mxu0 0.0
    %1066 = vmatprep.subr.mxu0 0.0
    %1067 = vmatpush1.msra.mxu0 0.0
    %1068 = vmatprep.subr.mxu0 0.0
    %1069 = vmatpush1.msra.mxu0 0.0
    %1070 = vmatprep.subr.mxu0 0.0
    %1071 = vmatpush1.msra.mxu0 0.0
    %1072 = vmatprep.subr.mxu0 0.0
    %1073 = vmatpush1.msra.mxu0 0.0
    %1074 = vmatprep.subr.mxu0 0.0
    %1075 = vmatpush1.msra.mxu0 0.0
    %1076 = vmatprep.subr.mxu0 0.0
    %1077 = vmatpush1.msra.mxu0 0.0
    %1078 = vmatprep.subr.mxu0 0.0
    %1079 = vmatpush1.msra.mxu0 0.0
    %1080 = vmatprep.subr.mxu0 0.0
    %1081 = vmatpush1.msra.mxu0 0.0
    %1082 = vmatprep.subr.mxu0 0.0
    %1083 = vmatpush1.msra.mxu0 0.0
    %1084 = vmatprep.subr.mxu0 %v896
    %1085 = vmatpush1.msra.mxu0 %v895
    %1086 = vmatprep.subr.mxu0 %v894
    %1087 = vmatpush1.msra.mxu0 %v893
    %1088 = vmatprep.subr.mxu0 %v892
    %1089 = vmatpush1.msra.mxu0 %v891
    %1090 = vmatprep.subr.mxu0 %v890
    %1091 = vmatpush1.msra.mxu0 %v889
    %1092 = vmatprep.subr.mxu0 0.0
    %1093 = vmatpush2.msra.mxu0 0.0
    %1094 = vmatprep.subr.mxu0 0.0
    %1095 = vmatpush2.msra.mxu0 0.0
    %1096 = vmatprep.subr.mxu0 0.0
    %1097 = vmatpush2.msra.mxu0 0.0
    %1098 = vmatprep.subr.mxu0 0.0
    %1099 = vmatpush2.msra.mxu0 0.0
    %1100 = vmatprep.subr.mxu0 0.0
    %1101 = vmatpush2.msra.mxu0 0.0
    %1102 = vmatprep.subr.mxu0 0.0
    %1103 = vmatpush2.msra.mxu0 0.0
    %1104 = vmatprep.subr.mxu0 0.0
    %1105 = vmatpush2.msra.mxu0 0.0
    %1106 = vmatprep.subr.mxu0 0.0
    %1107 = vmatpush2.msra.mxu0 0.0
    %1108 = vmatprep.subr.mxu0 0.0
    %1109 = vmatpush2.msra.mxu0 0.0
    %1110 = vmatprep.subr.mxu0 0.0
    %1111 = vmatpush2.msra.mxu0 0.0
    %1112 = vmatprep.subr.mxu0 0.0
    %1113 = vmatpush2.msra.mxu0 0.0
    %1114 = vmatprep.subr.mxu0 0.0
    %1115 = vmatpush2.msra.mxu0 0.0
    %1116 = vmatprep.subr.mxu0 0.0
    %1117 = vmatpush2.msra.mxu0 0.0
    %1118 = vmatprep.subr.mxu0 0.0
    %1119 = vmatpush2.msra.mxu0 0.0
    %1120 = vmatprep.subr.mxu0 0.0
    %1121 = vmatpush2.msra.mxu0 0.0
    %1122 = vmatprep.subr.mxu0 0.0
    %1123 = vmatpush2.msra.mxu0 0.0
    %1124 = vmatprep.mubr.f32.mxu0 0.0
    %1125 = vmatmul.mubr.f32.gmra.mxu0 %v928
    %v1126 = vpop.f32.mrf.mxu0
    %v1127 = vadd.f32 %v910, %v1126
    %v1128 = vpop.f32.mrf.mxu0
    %v1129 = vadd.f32 %v910, %v1128
    %1130 = vmatprep.mubr.f32.mxu0 0.0
    %1131 = vmatmul.mubr.f32.gmra.mxu0 %v931
    %v1132 = vpop.f32.mrf.mxu0
    %v1133 = vadd.f32 %v915, %v1132
    %v1134 = vpop.f32.mrf.mxu0
    %v1135 = vadd.f32 %v915, %v1134
    %1136 = vmatprep.mubr.f32.mxu0 0.0
    %1137 = vmatmul.mubr.f32.gmra.mxu0 %v934
    %v1138 = vpop.f32.mrf.mxu0
    %v1139 = vadd.f32 %v920, %v1138
    %v1140 = vpop.f32.mrf.mxu0
    %v1141 = vadd.f32 %v920, %v1140
    %1142 = vmatprep.mubr.f32.mxu0 0.0
    %1143 = vmatmul.mubr.f32.gmra.mxu0 %v937
    %v1144 = vpop.f32.mrf.mxu0
    %v1145 = vadd.f32 %v925, %v1144
    %v1146 = vpop.f32.mrf.mxu0
    %v1147 = vadd.f32 %v925, %v1146
    %1148 = vdwg.mxu0
    %v1149 = vmul.f32 %v1127, 0.5
    %v1150 = vmul.f32 %v1129, 0.5
    %v1151 = vmul.f32 %v1133, 0.5
    %v1152 = vmul.f32 %v1135, 0.5
    %v1153 = vmul.f32 %v1139, 0.5
    %v1154 = vmul.f32 %v1141, 0.5
    %v1155 = vmul.f32 %v1145, 0.5
    %v1156 = vmul.f32 %v1147, 0.5
    %v1157 = vtanh.pop %v1149
    %v1158 = vtanh.pop %v1150
    %v1159 = vtanh.pop %v1151
    %v1160 = vtanh.pop %v1152
    %v1161 = vtanh.pop %v1153
    %v1162 = vtanh.pop %v1154
    %v1163 = vtanh.pop %v1155
    %v1164 = vtanh.pop %v1156
    %v1165 = vmul.f32 %v1157, 0.5
    %v1166 = vmul.f32 %v1158, 0.5
    %v1167 = vmul.f32 %v1159, 0.5
    %v1168 = vmul.f32 %v1160, 0.5
    %v1169 = vmul.f32 %v1161, 0.5
    %v1170 = vmul.f32 %v1162, 0.5
    %v1171 = vmul.f32 %v1163, 0.5
    %v1172 = vmul.f32 %v1164, 0.5
    %v1173 = vadd.f32 %v1165, 0.5
    %v1174 = vadd.f32 %v1166, 0.5
    %v1175 = vadd.f32 %v1167, 0.5
    %v1176 = vadd.f32 %v1168, 0.5
    %v1177 = vadd.f32 %v1169, 0.5
    %v1178 = vadd.f32 %v1170, 0.5
    %v1179 = vadd.f32 %v1171, 0.5
    %v1180 = vadd.f32 %v1172, 0.5
    %s1181 = scalar_lea.vmem %s1, 128
    %v1182 = vld [vmem:[%s1181] sm:$0xff]
    %v1183 = vld [vmem:[%s1181 + $0x8] sm:$0xff]
    %v1184 = vld [vmem:[%s1181 + $0x10] sm:$0xff]
    %v1185 = vld [vmem:[%s1181 + $0x18] sm:$0xff]
    %s1186 = scalar_lea.vmem %s2, 128
    %v1187 = vld [vmem:[%s1186] sm:$0xff]
    %v1188 = vld [vmem:[%s1186 + $0x8] sm:$0xff]
    %v1189 = vld [vmem:[%s1186 + $0x10] sm:$0xff]
    %v1190 = vld [vmem:[%s1186 + $0x18] sm:$0xff]
    %1192 = vset.pattern.permute.xlu0 0
    %1193 = vperm.xlu0 %1192, %v1187
    %v1194 = vpop.permute.xlu0 %1193
    %1197 = vset.pattern.permute.xlu0 0
    %1198 = vperm.xlu0 %1197, %v1188
    %v1199 = vpop.permute.xlu0 %1198
    %1202 = vset.pattern.permute.xlu0 0
    %1203 = vperm.xlu0 %1202, %v1189
    %v1204 = vpop.permute.xlu0 %1203
    %1207 = vset.pattern.permute.xlu0 0
    %1208 = vperm.xlu0 %1207, %v1190
    %v1209 = vpop.permute.xlu0 %1208
    %v1212 = vsel %vm74, %v1182, 0
    %v1215 = vsel %vm74, %v1183, 0
    %v1218 = vsel %vm74, %v1184, 0
    %v1221 = vsel %vm74, %v1185, 0
    %1223 = vmatprep.subr.mxu0 0.0
    %1224 = vmatpush1.msra.mxu0 0.0
    %1225 = vmatprep.subr.mxu0 0.0
    %1226 = vmatpush1.msra.mxu0 0.0
    %1227 = vmatprep.subr.mxu0 0.0
    %1228 = vmatpush1.msra.mxu0 0.0
    %1229 = vmatprep.subr.mxu0 0.0
    %1230 = vmatpush1.msra.mxu0 0.0
    %1231 = vmatprep.subr.mxu0 0.0
    %1232 = vmatpush1.msra.mxu0 0.0
    %1233 = vmatprep.subr.mxu0 0.0
    %1234 = vmatpush1.msra.mxu0 0.0
    %1235 = vmatprep.subr.mxu0 0.0
    %1236 = vmatpush1.msra.mxu0 0.0
    %1237 = vmatprep.subr.mxu0 0.0
    %1238 = vmatpush1.msra.mxu0 0.0
    %1239 = vmatprep.subr.mxu0 0.0
    %1240 = vmatpush1.msra.mxu0 0.0
    %1241 = vmatprep.subr.mxu0 0.0
    %1242 = vmatpush1.msra.mxu0 0.0
    %1243 = vmatprep.subr.mxu0 0.0
    %1244 = vmatpush1.msra.mxu0 0.0
    %1245 = vmatprep.subr.mxu0 0.0
    %1246 = vmatpush1.msra.mxu0 0.0
    %1247 = vmatprep.subr.mxu0 %v1059
    %1248 = vmatpush1.msra.mxu0 %v1058
    %1249 = vmatprep.subr.mxu0 %v1057
    %1250 = vmatpush1.msra.mxu0 %v1056
    %1251 = vmatprep.subr.mxu0 %v1055
    %1252 = vmatpush1.msra.mxu0 %v1054
    %1253 = vmatprep.subr.mxu0 %v1053
    %1254 = vmatpush1.msra.mxu0 %v1052
    %1255 = vmatprep.subr.mxu0 0.0
    %1256 = vmatpush2.msra.mxu0 0.0
    %1257 = vmatprep.subr.mxu0 0.0
    %1258 = vmatpush2.msra.mxu0 0.0
    %1259 = vmatprep.subr.mxu0 0.0
    %1260 = vmatpush2.msra.mxu0 0.0
    %1261 = vmatprep.subr.mxu0 0.0
    %1262 = vmatpush2.msra.mxu0 0.0
    %1263 = vmatprep.subr.mxu0 0.0
    %1264 = vmatpush2.msra.mxu0 0.0
    %1265 = vmatprep.subr.mxu0 0.0
    %1266 = vmatpush2.msra.mxu0 0.0
    %1267 = vmatprep.subr.mxu0 0.0
    %1268 = vmatpush2.msra.mxu0 0.0
    %1269 = vmatprep.subr.mxu0 0.0
    %1270 = vmatpush2.msra.mxu0 0.0
    %1271 = vmatprep.subr.mxu0 0.0
    %1272 = vmatpush2.msra.mxu0 0.0
    %1273 = vmatprep.subr.mxu0 0.0
    %1274 = vmatpush2.msra.mxu0 0.0
    %1275 = vmatprep.subr.mxu0 0.0
    %1276 = vmatpush2.msra.mxu0 0.0
    %1277 = vmatprep.subr.mxu0 0.0
    %1278 = vmatpush2.msra.mxu0 0.0
    %1279 = vmatprep.subr.mxu0 0.0
    %1280 = vmatpush2.msra.mxu0 0.0
    %1281 = vmatprep.subr.mxu0 0.0
    %1282 = vmatpush2.msra.mxu0 0.0
    %1283 = vmatprep.subr.mxu0 0.0
    %1284 = vmatpush2.msra.mxu0 0.0
    %1285 = vmatprep.subr.mxu0 0.0
    %1286 = vmatpush2.msra.mxu0 0.0
    %1287 = vmatprep.mubr.f32.mxu0 0.0
    %1288 = vmatmul.mubr.f32.gmra.mxu0 %v1212
    %v1289 = vpop.f32.mrf.mxu0
    %v1290 = vadd.f32 %v1194, %v1289
    %v1291 = vpop.f32.mrf.mxu0
    %v1292 = vadd.f32 %v1194, %v1291
    %1293 = vmatprep.mubr.f32.mxu0 0.0
    %1294 = vmatmul.mubr.f32.gmra.mxu0 %v1215
    %v1295 = vpop.f32.mrf.mxu0
    %v1296 = vadd.f32 %v1199, %v1295
    %v1297 = vpop.f32.mrf.mxu0
    %v1298 = vadd.f32 %v1199, %v1297
    %1299 = vmatprep.mubr.f32.mxu0 0.0
    %1300 = vmatmul.mubr.f32.gmra.mxu0 %v1218
    %v1301 = vpop.f32.mrf.mxu0
    %v1302 = vadd.f32 %v1204, %v1301
    %v1303 = vpop.f32.mrf.mxu0
    %v1304 = vadd.f32 %v1204, %v1303
    %1305 = vmatprep.mubr.f32.mxu0 0.0
    %1306 = vmatmul.mubr.f32.gmra.mxu0 %v1221
    %v1307 = vpop.f32.mrf.mxu0
    %v1308 = vadd.f32 %v1209, %v1307
    %v1309 = vpop.f32.mrf.mxu0
    %v1310 = vadd.f32 %v1209, %v1309
    %1311 = vdwg.mxu0
    %v1312 = vmul.f32 %v1290, 0.5
    %v1313 = vmul.f32 %v1292, 0.5
    %v1314 = vmul.f32 %v1296, 0.5
    %v1315 = vmul.f32 %v1298, 0.5
    %v1316 = vmul.f32 %v1302, 0.5
    %v1317 = vmul.f32 %v1304, 0.5
    %v1318 = vmul.f32 %v1308, 0.5
    %v1319 = vmul.f32 %v1310, 0.5
    %v1320 = vtanh.pop %v1312
    %v1321 = vtanh.pop %v1313
    %v1322 = vtanh.pop %v1314
    %v1323 = vtanh.pop %v1315
    %v1324 = vtanh.pop %v1316
    %v1325 = vtanh.pop %v1317
    %v1326 = vtanh.pop %v1318
    %v1327 = vtanh.pop %v1319
    %v1328 = vmul.f32 %v1320, 0.5
    %v1329 = vmul.f32 %v1321, 0.5
    %v1330 = vmul.f32 %v1322, 0.5
    %v1331 = vmul.f32 %v1323, 0.5
    %v1332 = vmul.f32 %v1324, 0.5
    %v1333 = vmul.f32 %v1325, 0.5
    %v1334 = vmul.f32 %v1326, 0.5
    %v1335 = vmul.f32 %v1327, 0.5
    %v1336 = vadd.f32 %v1328, 0.5
    %v1337 = vadd.f32 %v1329, 0.5
    %v1338 = vadd.f32 %v1330, 0.5
    %v1339 = vadd.f32 %v1331, 0.5
    %v1340 = vadd.f32 %v1332, 0.5
    %v1341 = vadd.f32 %v1333, 0.5
    %v1342 = vadd.f32 %v1334, 0.5
    %v1343 = vadd.f32 %v1335, 0.5
    %1344 = vmatprep.subr.mxu0 0.0
    %1345 = vmatpush1.msra.mxu0 0.0
    %1346 = vmatprep.subr.mxu0 0.0
    %1347 = vmatpush1.msra.mxu0 0.0
    %1348 = vmatprep.subr.mxu0 0.0
    %1349 = vmatpush1.msra.mxu0 0.0
    %1350 = vmatprep.subr.mxu0 0.0
    %1351 = vmatpush1.msra.mxu0 0.0
    %1352 = vmatprep.subr.mxu0 0.0
    %1353 = vmatpush1.msra.mxu0 0.0
    %1354 = vmatprep.subr.mxu0 0.0
    %1355 = vmatpush1.msra.mxu0 0.0
    %1356 = vmatprep.subr.mxu0 0.0
    %1357 = vmatpush1.msra.mxu0 0.0
    %1358 = vmatprep.subr.mxu0 0.0
    %1359 = vmatpush1.msra.mxu0 0.0
    %1360 = vmatprep.subr.mxu0 0.0
    %1361 = vmatpush1.msra.mxu0 0.0
    %1362 = vmatprep.subr.mxu0 0.0
    %1363 = vmatpush1.msra.mxu0 0.0
    %1364 = vmatprep.subr.mxu0 0.0
    %1365 = vmatpush1.msra.mxu0 0.0
    %1366 = vmatprep.subr.mxu0 0.0
    %1367 = vmatpush1.msra.mxu0 0.0
    %1368 = vmatprep.subr.mxu0 %v1180
    %1369 = vmatpush1.msra.mxu0 %v1179
    %1370 = vmatprep.subr.mxu0 %v1178
    %1371 = vmatpush1.msra.mxu0 %v1177
    %1372 = vmatprep.subr.mxu0 %v1176
    %1373 = vmatpush1.msra.mxu0 %v1175
    %1374 = vmatprep.subr.mxu0 %v1174
    %1375 = vmatpush1.msra.mxu0 %v1173
    %1376 = vmatprep.subr.mxu0 0.0
    %1377 = vmatpush2.msra.mxu0 0.0
    %1378 = vmatprep.subr.mxu0 0.0
    %1379 = vmatpush2.msra.mxu0 0.0
    %1380 = vmatprep.subr.mxu0 0.0
    %1381 = vmatpush2.msra.mxu0 0.0
    %1382 = vmatprep.subr.mxu0 0.0
    %1383 = vmatpush2.msra.mxu0 0.0
    %1384 = vmatprep.subr.mxu0 0.0
    %1385 = vmatpush2.msra.mxu0 0.0
    %1386 = vmatprep.subr.mxu0 0.0
    %1387 = vmatpush2.msra.mxu0 0.0
    %1388 = vmatprep.subr.mxu0 0.0
    %1389 = vmatpush2.msra.mxu0 0.0
    %1390 = vmatprep.subr.mxu0 0.0
    %1391 = vmatpush2.msra.mxu0 0.0
    %1392 = vmatprep.subr.mxu0 0.0
    %1393 = vmatpush2.msra.mxu0 0.0
    %1394 = vmatprep.subr.mxu0 0.0
    %1395 = vmatpush2.msra.mxu0 0.0
    %1396 = vmatprep.subr.mxu0 0.0
    %1397 = vmatpush2.msra.mxu0 0.0
    %1398 = vmatprep.subr.mxu0 0.0
    %1399 = vmatpush2.msra.mxu0 0.0
    %1400 = vmatprep.subr.mxu0 0.0
    %1401 = vmatpush2.msra.mxu0 0.0
    %1402 = vmatprep.subr.mxu0 0.0
    %1403 = vmatpush2.msra.mxu0 0.0
    %1404 = vmatprep.subr.mxu0 0.0
    %1405 = vmatpush2.msra.mxu0 0.0
    %1406 = vmatprep.subr.mxu0 0.0
    %1407 = vmatpush2.msra.mxu0 0.0
    %1408 = vmatprep.mubr.f32.mxu0 0.0
    %1409 = vmatmul.mubr.f32.gmra.mxu0 %v1212
    %v1410 = vpop.f32.mrf.mxu0
    %v1411 = vadd.f32 %v1194, %v1410
    %v1412 = vpop.f32.mrf.mxu0
    %v1413 = vadd.f32 %v1194, %v1412
    %1414 = vmatprep.mubr.f32.mxu0 0.0
    %1415 = vmatmul.mubr.f32.gmra.mxu0 %v1215
    %v1416 = vpop.f32.mrf.mxu0
    %v1417 = vadd.f32 %v1199, %v1416
    %v1418 = vpop.f32.mrf.mxu0
    %v1419 = vadd.f32 %v1199, %v1418
    %1420 = vmatprep.mubr.f32.mxu0 0.0
    %1421 = vmatmul.mubr.f32.gmra.mxu0 %v1218
    %v1422 = vpop.f32.mrf.mxu0
    %v1423 = vadd.f32 %v1204, %v1422
    %v1424 = vpop.f32.mrf.mxu0
    %v1425 = vadd.f32 %v1204, %v1424
    %1426 = vmatprep.mubr.f32.mxu0 0.0
    %1427 = vmatmul.mubr.f32.gmra.mxu0 %v1221
    %v1428 = vpop.f32.mrf.mxu0
    %v1429 = vadd.f32 %v1209, %v1428
    %v1430 = vpop.f32.mrf.mxu0
    %v1431 = vadd.f32 %v1209, %v1430
    %1432 = vdwg.mxu0
    %v1433 = vmul.f32 %v1411, 0.5
    %v1434 = vmul.f32 %v1413, 0.5
    %v1435 = vmul.f32 %v1417, 0.5
    %v1436 = vmul.f32 %v1419, 0.5
    %v1437 = vmul.f32 %v1423, 0.5
    %v1438 = vmul.f32 %v1425, 0.5
    %v1439 = vmul.f32 %v1429, 0.5
    %v1440 = vmul.f32 %v1431, 0.5
    %v1441 = vtanh.pop %v1433
    %v1442 = vtanh.pop %v1434
    %v1443 = vtanh.pop %v1435
    %v1444 = vtanh.pop %v1436
    %v1445 = vtanh.pop %v1437
    %v1446 = vtanh.pop %v1438
    %v1447 = vtanh.pop %v1439
    %v1448 = vtanh.pop %v1440
    %v1449 = vmul.f32 %v1441, 0.5
    %v1450 = vmul.f32 %v1442, 0.5
    %v1451 = vmul.f32 %v1443, 0.5
    %v1452 = vmul.f32 %v1444, 0.5
    %v1453 = vmul.f32 %v1445, 0.5
    %v1454 = vmul.f32 %v1446, 0.5
    %v1455 = vmul.f32 %v1447, 0.5
    %v1456 = vmul.f32 %v1448, 0.5
    %v1457 = vadd.f32 %v1449, 0.5
    %v1458 = vadd.f32 %v1450, 0.5
    %v1459 = vadd.f32 %v1451, 0.5
    %v1460 = vadd.f32 %v1452, 0.5
    %v1461 = vadd.f32 %v1453, 0.5
    %v1462 = vadd.f32 %v1454, 0.5
    %v1463 = vadd.f32 %v1455, 0.5
    %v1464 = vadd.f32 %v1456, 0.5
    %s1465 = scalar_lea.vmem %s1, 160
    %v1466 = vld [vmem:[%s1465] sm:$0xff]
    %v1467 = vld [vmem:[%s1465 + $0x8] sm:$0xff]
    %v1468 = vld [vmem:[%s1465 + $0x10] sm:$0xff]
    %v1469 = vld [vmem:[%s1465 + $0x18] sm:$0xff]
    %s1470 = scalar_lea.vmem %s2, 160
    %v1471 = vld [vmem:[%s1470] sm:$0xff]
    %v1472 = vld [vmem:[%s1470 + $0x8] sm:$0xff]
    %v1473 = vld [vmem:[%s1470 + $0x10] sm:$0xff]
    %v1474 = vld [vmem:[%s1470 + $0x18] sm:$0xff]
    %1476 = vset.pattern.permute.xlu0 0
    %1477 = vperm.xlu0 %1476, %v1471
    %v1478 = vpop.permute.xlu0 %1477
    %1481 = vset.pattern.permute.xlu0 0
    %1482 = vperm.xlu0 %1481, %v1472
    %v1483 = vpop.permute.xlu0 %1482
    %1486 = vset.pattern.permute.xlu0 0
    %1487 = vperm.xlu0 %1486, %v1473
    %v1488 = vpop.permute.xlu0 %1487
    %1491 = vset.pattern.permute.xlu0 0
    %1492 = vperm.xlu0 %1491, %v1474
    %v1493 = vpop.permute.xlu0 %1492
    %v1496 = vsel %vm74, %v1466, 0
    %v1499 = vsel %vm74, %v1467, 0
    %v1502 = vsel %vm74, %v1468, 0
    %v1505 = vsel %vm74, %v1469, 0
    %1507 = vmatprep.subr.mxu0 0.0
    %1508 = vmatpush1.msra.mxu0 0.0
    %1509 = vmatprep.subr.mxu0 0.0
    %1510 = vmatpush1.msra.mxu0 0.0
    %1511 = vmatprep.subr.mxu0 0.0
    %1512 = vmatpush1.msra.mxu0 0.0
    %1513 = vmatprep.subr.mxu0 0.0
    %1514 = vmatpush1.msra.mxu0 0.0
    %1515 = vmatprep.subr.mxu0 0.0
    %1516 = vmatpush1.msra.mxu0 0.0
    %1517 = vmatprep.subr.mxu0 0.0
    %1518 = vmatpush1.msra.mxu0 0.0
    %1519 = vmatprep.subr.mxu0 0.0
    %1520 = vmatpush1.msra.mxu0 0.0
    %1521 = vmatprep.subr.mxu0 0.0
    %1522 = vmatpush1.msra.mxu0 0.0
    %1523 = vmatprep.subr.mxu0 0.0
    %1524 = vmatpush1.msra.mxu0 0.0
    %1525 = vmatprep.subr.mxu0 0.0
    %1526 = vmatpush1.msra.mxu0 0.0
    %1527 = vmatprep.subr.mxu0 0.0
    %1528 = vmatpush1.msra.mxu0 0.0
    %1529 = vmatprep.subr.mxu0 0.0
    %1530 = vmatpush1.msra.mxu0 0.0
    %1531 = vmatprep.subr.mxu0 %v1343
    %1532 = vmatpush1.msra.mxu0 %v1342
    %1533 = vmatprep.subr.mxu0 %v1341
    %1534 = vmatpush1.msra.mxu0 %v1340
    %1535 = vmatprep.subr.mxu0 %v1339
    %1536 = vmatpush1.msra.mxu0 %v1338
    %1537 = vmatprep.subr.mxu0 %v1337
    %1538 = vmatpush1.msra.mxu0 %v1336
    %1539 = vmatprep.subr.mxu0 0.0
    %1540 = vmatpush2.msra.mxu0 0.0
    %1541 = vmatprep.subr.mxu0 0.0
    %1542 = vmatpush2.msra.mxu0 0.0
    %1543 = vmatprep.subr.mxu0 0.0
    %1544 = vmatpush2.msra.mxu0 0.0
    %1545 = vmatprep.subr.mxu0 0.0
    %1546 = vmatpush2.msra.mxu0 0.0
    %1547 = vmatprep.subr.mxu0 0.0
    %1548 = vmatpush2.msra.mxu0 0.0
    %1549 = vmatprep.subr.mxu0 0.0
    %1550 = vmatpush2.msra.mxu0 0.0
    %1551 = vmatprep.subr.mxu0 0.0
    %1552 = vmatpush2.msra.mxu0 0.0
    %1553 = vmatprep.subr.mxu0 0.0
    %1554 = vmatpush2.msra.mxu0 0.0
    %1555 = vmatprep.subr.mxu0 0.0
    %1556 = vmatpush2.msra.mxu0 0.0
    %1557 = vmatprep.subr.mxu0 0.0
    %1558 = vmatpush2.msra.mxu0 0.0
    %1559 = vmatprep.subr.mxu0 0.0
    %1560 = vmatpush2.msra.mxu0 0.0
    %1561 = vmatprep.subr.mxu0 0.0
    %1562 = vmatpush2.msra.mxu0 0.0
    %1563 = vmatprep.subr.mxu0 0.0
    %1564 = vmatpush2.msra.mxu0 0.0
    %1565 = vmatprep.subr.mxu0 0.0
    %1566 = vmatpush2.msra.mxu0 0.0
    %1567 = vmatprep.subr.mxu0 0.0
    %1568 = vmatpush2.msra.mxu0 0.0
    %1569 = vmatprep.subr.mxu0 0.0
    %1570 = vmatpush2.msra.mxu0 0.0
    %1571 = vmatprep.mubr.f32.mxu0 0.0
    %1572 = vmatmul.mubr.f32.gmra.mxu0 %v1496
    %v1573 = vpop.f32.mrf.mxu0
    %v1574 = vadd.f32 %v1478, %v1573
    %v1575 = vpop.f32.mrf.mxu0
    %v1576 = vadd.f32 %v1478, %v1575
    %1577 = vmatprep.mubr.f32.mxu0 0.0
    %1578 = vmatmul.mubr.f32.gmra.mxu0 %v1499
    %v1579 = vpop.f32.mrf.mxu0
    %v1580 = vadd.f32 %v1483, %v1579
    %v1581 = vpop.f32.mrf.mxu0
    %v1582 = vadd.f32 %v1483, %v1581
    %1583 = vmatprep.mubr.f32.mxu0 0.0
    %1584 = vmatmul.mubr.f32.gmra.mxu0 %v1502
    %v1585 = vpop.f32.mrf.mxu0
    %v1586 = vadd.f32 %v1488, %v1585
    %v1587 = vpop.f32.mrf.mxu0
    %v1588 = vadd.f32 %v1488, %v1587
    %1589 = vmatprep.mubr.f32.mxu0 0.0
    %1590 = vmatmul.mubr.f32.gmra.mxu0 %v1505
    %v1591 = vpop.f32.mrf.mxu0
    %v1592 = vadd.f32 %v1493, %v1591
    %v1593 = vpop.f32.mrf.mxu0
    %v1594 = vadd.f32 %v1493, %v1593
    %1595 = vdwg.mxu0
    %v1596 = vmul.f32 %v1574, 0.5
    %v1597 = vmul.f32 %v1576, 0.5
    %v1598 = vmul.f32 %v1580, 0.5
    %v1599 = vmul.f32 %v1582, 0.5
    %v1600 = vmul.f32 %v1586, 0.5
    %v1601 = vmul.f32 %v1588, 0.5
    %v1602 = vmul.f32 %v1592, 0.5
    %v1603 = vmul.f32 %v1594, 0.5
    %v1604 = vtanh.pop %v1596
    %v1605 = vtanh.pop %v1597
    %v1606 = vtanh.pop %v1598
    %v1607 = vtanh.pop %v1599
    %v1608 = vtanh.pop %v1600
    %v1609 = vtanh.pop %v1601
    %v1610 = vtanh.pop %v1602
    %v1611 = vtanh.pop %v1603
    %v1612 = vmul.f32 %v1604, 0.5
    %v1613 = vmul.f32 %v1605, 0.5
    %v1614 = vmul.f32 %v1606, 0.5
    %v1615 = vmul.f32 %v1607, 0.5
    %v1616 = vmul.f32 %v1608, 0.5
    %v1617 = vmul.f32 %v1609, 0.5
    %v1618 = vmul.f32 %v1610, 0.5
    %v1619 = vmul.f32 %v1611, 0.5
    %v1620 = vadd.f32 %v1612, 0.5
    %v1621 = vadd.f32 %v1613, 0.5
    %v1622 = vadd.f32 %v1614, 0.5
    %v1623 = vadd.f32 %v1615, 0.5
    %v1624 = vadd.f32 %v1616, 0.5
    %v1625 = vadd.f32 %v1617, 0.5
    %v1626 = vadd.f32 %v1618, 0.5
    %v1627 = vadd.f32 %v1619, 0.5
    %1628 = vmatprep.subr.mxu0 0.0
    %1629 = vmatpush1.msra.mxu0 0.0
    %1630 = vmatprep.subr.mxu0 0.0
    %1631 = vmatpush1.msra.mxu0 0.0
    %1632 = vmatprep.subr.mxu0 0.0
    %1633 = vmatpush1.msra.mxu0 0.0
    %1634 = vmatprep.subr.mxu0 0.0
    %1635 = vmatpush1.msra.mxu0 0.0
    %1636 = vmatprep.subr.mxu0 0.0
    %1637 = vmatpush1.msra.mxu0 0.0
    %1638 = vmatprep.subr.mxu0 0.0
    %1639 = vmatpush1.msra.mxu0 0.0
    %1640 = vmatprep.subr.mxu0 0.0
    %1641 = vmatpush1.msra.mxu0 0.0
    %1642 = vmatprep.subr.mxu0 0.0
    %1643 = vmatpush1.msra.mxu0 0.0
    %1644 = vmatprep.subr.mxu0 0.0
    %1645 = vmatpush1.msra.mxu0 0.0
    %1646 = vmatprep.subr.mxu0 0.0
    %1647 = vmatpush1.msra.mxu0 0.0
    %1648 = vmatprep.subr.mxu0 0.0
    %1649 = vmatpush1.msra.mxu0 0.0
    %1650 = vmatprep.subr.mxu0 0.0
    %1651 = vmatpush1.msra.mxu0 0.0
    %1652 = vmatprep.subr.mxu0 %v1464
    %1653 = vmatpush1.msra.mxu0 %v1463
    %1654 = vmatprep.subr.mxu0 %v1462
    %1655 = vmatpush1.msra.mxu0 %v1461
    %1656 = vmatprep.subr.mxu0 %v1460
    %1657 = vmatpush1.msra.mxu0 %v1459
    %1658 = vmatprep.subr.mxu0 %v1458
    %1659 = vmatpush1.msra.mxu0 %v1457
    %1660 = vmatprep.subr.mxu0 0.0
    %1661 = vmatpush2.msra.mxu0 0.0
    %1662 = vmatprep.subr.mxu0 0.0
    %1663 = vmatpush2.msra.mxu0 0.0
    %1664 = vmatprep.subr.mxu0 0.0
    %1665 = vmatpush2.msra.mxu0 0.0
    %1666 = vmatprep.subr.mxu0 0.0
    %1667 = vmatpush2.msra.mxu0 0.0
    %1668 = vmatprep.subr.mxu0 0.0
    %1669 = vmatpush2.msra.mxu0 0.0
    %1670 = vmatprep.subr.mxu0 0.0
    %1671 = vmatpush2.msra.mxu0 0.0
    %1672 = vmatprep.subr.mxu0 0.0
    %1673 = vmatpush2.msra.mxu0 0.0
    %1674 = vmatprep.subr.mxu0 0.0
    %1675 = vmatpush2.msra.mxu0 0.0
    %1676 = vmatprep.subr.mxu0 0.0
    %1677 = vmatpush2.msra.mxu0 0.0
    %1678 = vmatprep.subr.mxu0 0.0
    %1679 = vmatpush2.msra.mxu0 0.0
    %1680 = vmatprep.subr.mxu0 0.0
    %1681 = vmatpush2.msra.mxu0 0.0
    %1682 = vmatprep.subr.mxu0 0.0
    %1683 = vmatpush2.msra.mxu0 0.0
    %1684 = vmatprep.subr.mxu0 0.0
    %1685 = vmatpush2.msra.mxu0 0.0
    %1686 = vmatprep.subr.mxu0 0.0
    %1687 = vmatpush2.msra.mxu0 0.0
    %1688 = vmatprep.subr.mxu0 0.0
    %1689 = vmatpush2.msra.mxu0 0.0
    %1690 = vmatprep.subr.mxu0 0.0
    %1691 = vmatpush2.msra.mxu0 0.0
    %1692 = vmatprep.mubr.f32.mxu0 0.0
    %1693 = vmatmul.mubr.f32.gmra.mxu0 %v1496
    %v1694 = vpop.f32.mrf.mxu0
    %v1695 = vadd.f32 %v1478, %v1694
    %v1696 = vpop.f32.mrf.mxu0
    %v1697 = vadd.f32 %v1478, %v1696
    %1698 = vmatprep.mubr.f32.mxu0 0.0
    %1699 = vmatmul.mubr.f32.gmra.mxu0 %v1499
    %v1700 = vpop.f32.mrf.mxu0
    %v1701 = vadd.f32 %v1483, %v1700
    %v1702 = vpop.f32.mrf.mxu0
    %v1703 = vadd.f32 %v1483, %v1702
    %1704 = vmatprep.mubr.f32.mxu0 0.0
    %1705 = vmatmul.mubr.f32.gmra.mxu0 %v1502
    %v1706 = vpop.f32.mrf.mxu0
    %v1707 = vadd.f32 %v1488, %v1706
    %v1708 = vpop.f32.mrf.mxu0
    %v1709 = vadd.f32 %v1488, %v1708
    %1710 = vmatprep.mubr.f32.mxu0 0.0
    %1711 = vmatmul.mubr.f32.gmra.mxu0 %v1505
    %v1712 = vpop.f32.mrf.mxu0
    %v1713 = vadd.f32 %v1493, %v1712
    %v1714 = vpop.f32.mrf.mxu0
    %v1715 = vadd.f32 %v1493, %v1714
    %1716 = vdwg.mxu0
    %v1717 = vmul.f32 %v1695, 0.5
    %v1718 = vmul.f32 %v1697, 0.5
    %v1719 = vmul.f32 %v1701, 0.5
    %v1720 = vmul.f32 %v1703, 0.5
    %v1721 = vmul.f32 %v1707, 0.5
    %v1722 = vmul.f32 %v1709, 0.5
    %v1723 = vmul.f32 %v1713, 0.5
    %v1724 = vmul.f32 %v1715, 0.5
    %v1725 = vtanh.pop %v1717
    %v1726 = vtanh.pop %v1718
    %v1727 = vtanh.pop %v1719
    %v1728 = vtanh.pop %v1720
    %v1729 = vtanh.pop %v1721
    %v1730 = vtanh.pop %v1722
    %v1731 = vtanh.pop %v1723
    %v1732 = vtanh.pop %v1724
    %v1733 = vmul.f32 %v1725, 0.5
    %v1734 = vmul.f32 %v1726, 0.5
    %v1735 = vmul.f32 %v1727, 0.5
    %v1736 = vmul.f32 %v1728, 0.5
    %v1737 = vmul.f32 %v1729, 0.5
    %v1738 = vmul.f32 %v1730, 0.5
    %v1739 = vmul.f32 %v1731, 0.5
    %v1740 = vmul.f32 %v1732, 0.5
    %v1741 = vadd.f32 %v1733, 0.5
    %v1742 = vadd.f32 %v1734, 0.5
    %v1743 = vadd.f32 %v1735, 0.5
    %v1744 = vadd.f32 %v1736, 0.5
    %v1745 = vadd.f32 %v1737, 0.5
    %v1746 = vadd.f32 %v1738, 0.5
    %v1747 = vadd.f32 %v1739, 0.5
    %v1748 = vadd.f32 %v1740, 0.5
    %s1749 = scalar_lea.vmem %s1, 192
    %v1750 = vld [vmem:[%s1749] sm:$0xff]
    %v1751 = vld [vmem:[%s1749 + $0x8] sm:$0xff]
    %v1752 = vld [vmem:[%s1749 + $0x10] sm:$0xff]
    %v1753 = vld [vmem:[%s1749 + $0x18] sm:$0xff]
    %s1754 = scalar_lea.vmem %s2, 192
    %v1755 = vld [vmem:[%s1754] sm:$0xff]
    %v1756 = vld [vmem:[%s1754 + $0x8] sm:$0xff]
    %v1757 = vld [vmem:[%s1754 + $0x10] sm:$0xff]
    %v1758 = vld [vmem:[%s1754 + $0x18] sm:$0xff]
    %1760 = vset.pattern.permute.xlu0 0
    %1761 = vperm.xlu0 %1760, %v1755
    %v1762 = vpop.permute.xlu0 %1761
    %1765 = vset.pattern.permute.xlu0 0
    %1766 = vperm.xlu0 %1765, %v1756
    %v1767 = vpop.permute.xlu0 %1766
    %1770 = vset.pattern.permute.xlu0 0
    %1771 = vperm.xlu0 %1770, %v1757
    %v1772 = vpop.permute.xlu0 %1771
    %1775 = vset.pattern.permute.xlu0 0
    %1776 = vperm.xlu0 %1775, %v1758
    %v1777 = vpop.permute.xlu0 %1776
    %v1780 = vsel %vm74, %v1750, 0
    %v1783 = vsel %vm74, %v1751, 0
    %v1786 = vsel %vm74, %v1752, 0
    %v1789 = vsel %vm74, %v1753, 0
    %1791 = vmatprep.subr.mxu0 0.0
    %1792 = vmatpush1.msra.mxu0 0.0
    %1793 = vmatprep.subr.mxu0 0.0
    %1794 = vmatpush1.msra.mxu0 0.0
    %1795 = vmatprep.subr.mxu0 0.0
    %1796 = vmatpush1.msra.mxu0 0.0
    %1797 = vmatprep.subr.mxu0 0.0
    %1798 = vmatpush1.msra.mxu0 0.0
    %1799 = vmatprep.subr.mxu0 0.0
    %1800 = vmatpush1.msra.mxu0 0.0
    %1801 = vmatprep.subr.mxu0 0.0
    %1802 = vmatpush1.msra.mxu0 0.0
    %1803 = vmatprep.subr.mxu0 0.0
    %1804 = vmatpush1.msra.mxu0 0.0
    %1805 = vmatprep.subr.mxu0 0.0
    %1806 = vmatpush1.msra.mxu0 0.0
    %1807 = vmatprep.subr.mxu0 0.0
    %1808 = vmatpush1.msra.mxu0 0.0
    %1809 = vmatprep.subr.mxu0 0.0
    %1810 = vmatpush1.msra.mxu0 0.0
    %1811 = vmatprep.subr.mxu0 0.0
    %1812 = vmatpush1.msra.mxu0 0.0
    %1813 = vmatprep.subr.mxu0 0.0
    %1814 = vmatpush1.msra.mxu0 0.0
    %1815 = vmatprep.subr.mxu0 %v1627
    %1816 = vmatpush1.msra.mxu0 %v1626
    %1817 = vmatprep.subr.mxu0 %v1625
    %1818 = vmatpush1.msra.mxu0 %v1624
    %1819 = vmatprep.subr.mxu0 %v1623
    %1820 = vmatpush1.msra.mxu0 %v1622
    %1821 = vmatprep.subr.mxu0 %v1621
    %1822 = vmatpush1.msra.mxu0 %v1620
    %1823 = vmatprep.subr.mxu0 0.0
    %1824 = vmatpush2.msra.mxu0 0.0
    %1825 = vmatprep.subr.mxu0 0.0
    %1826 = vmatpush2.msra.mxu0 0.0
    %1827 = vmatprep.subr.mxu0 0.0
    %1828 = vmatpush2.msra.mxu0 0.0
    %1829 = vmatprep.subr.mxu0 0.0
    %1830 = vmatpush2.msra.mxu0 0.0
    %1831 = vmatprep.subr.mxu0 0.0
    %1832 = vmatpush2.msra.mxu0 0.0
    %1833 = vmatprep.subr.mxu0 0.0
    %1834 = vmatpush2.msra.mxu0 0.0
    %1835 = vmatprep.subr.mxu0 0.0
    %1836 = vmatpush2.msra.mxu0 0.0
    %1837 = vmatprep.subr.mxu0 0.0
    %1838 = vmatpush2.msra.mxu0 0.0
    %1839 = vmatprep.subr.mxu0 0.0
    %1840 = vmatpush2.msra.mxu0 0.0
    %1841 = vmatprep.subr.mxu0 0.0
    %1842 = vmatpush2.msra.mxu0 0.0
    %1843 = vmatprep.subr.mxu0 0.0
    %1844 = vmatpush2.msra.mxu0 0.0
    %1845 = vmatprep.subr.mxu0 0.0
    %1846 = vmatpush2.msra.mxu0 0.0
    %1847 = vmatprep.subr.mxu0 0.0
    %1848 = vmatpush2.msra.mxu0 0.0
    %1849 = vmatprep.subr.mxu0 0.0
    %1850 = vmatpush2.msra.mxu0 0.0
    %1851 = vmatprep.subr.mxu0 0.0
    %1852 = vmatpush2.msra.mxu0 0.0
    %1853 = vmatprep.subr.mxu0 0.0
    %1854 = vmatpush2.msra.mxu0 0.0
    %1855 = vmatprep.mubr.f32.mxu0 0.0
    %1856 = vmatmul.mubr.f32.gmra.mxu0 %v1780
    %v1857 = vpop.f32.mrf.mxu0
    %v1858 = vadd.f32 %v1762, %v1857
    %v1859 = vpop.f32.mrf.mxu0
    %v1860 = vadd.f32 %v1762, %v1859
    %1861 = vmatprep.mubr.f32.mxu0 0.0
    %1862 = vmatmul.mubr.f32.gmra.mxu0 %v1783
    %v1863 = vpop.f32.mrf.mxu0
    %v1864 = vadd.f32 %v1767, %v1863
    %v1865 = vpop.f32.mrf.mxu0
    %v1866 = vadd.f32 %v1767, %v1865
    %1867 = vmatprep.mubr.f32.mxu0 0.0
    %1868 = vmatmul.mubr.f32.gmra.mxu0 %v1786
    %v1869 = vpop.f32.mrf.mxu0
    %v1870 = vadd.f32 %v1772, %v1869
    %v1871 = vpop.f32.mrf.mxu0
    %v1872 = vadd.f32 %v1772, %v1871
    %1873 = vmatprep.mubr.f32.mxu0 0.0
    %1874 = vmatmul.mubr.f32.gmra.mxu0 %v1789
    %v1875 = vpop.f32.mrf.mxu0
    %v1876 = vadd.f32 %v1777, %v1875
    %v1877 = vpop.f32.mrf.mxu0
    %v1878 = vadd.f32 %v1777, %v1877
    %1879 = vdwg.mxu0
    %v1880 = vmul.f32 %v1858, 0.5
    %v1881 = vmul.f32 %v1860, 0.5
    %v1882 = vmul.f32 %v1864, 0.5
    %v1883 = vmul.f32 %v1866, 0.5
    %v1884 = vmul.f32 %v1870, 0.5
    %v1885 = vmul.f32 %v1872, 0.5
    %v1886 = vmul.f32 %v1876, 0.5
    %v1887 = vmul.f32 %v1878, 0.5
    %v1888 = vtanh.pop %v1880
    %v1889 = vtanh.pop %v1881
    %v1890 = vtanh.pop %v1882
    %v1891 = vtanh.pop %v1883
    %v1892 = vtanh.pop %v1884
    %v1893 = vtanh.pop %v1885
    %v1894 = vtanh.pop %v1886
    %v1895 = vtanh.pop %v1887
    %v1896 = vmul.f32 %v1888, 0.5
    %v1897 = vmul.f32 %v1889, 0.5
    %v1898 = vmul.f32 %v1890, 0.5
    %v1899 = vmul.f32 %v1891, 0.5
    %v1900 = vmul.f32 %v1892, 0.5
    %v1901 = vmul.f32 %v1893, 0.5
    %v1902 = vmul.f32 %v1894, 0.5
    %v1903 = vmul.f32 %v1895, 0.5
    %v1904 = vadd.f32 %v1896, 0.5
    %v1905 = vadd.f32 %v1897, 0.5
    %v1906 = vadd.f32 %v1898, 0.5
    %v1907 = vadd.f32 %v1899, 0.5
    %v1908 = vadd.f32 %v1900, 0.5
    %v1909 = vadd.f32 %v1901, 0.5
    %v1910 = vadd.f32 %v1902, 0.5
    %v1911 = vadd.f32 %v1903, 0.5
    %1912 = vmatprep.subr.mxu0 0.0
    %1913 = vmatpush1.msra.mxu0 0.0
    %1914 = vmatprep.subr.mxu0 0.0
    %1915 = vmatpush1.msra.mxu0 0.0
    %1916 = vmatprep.subr.mxu0 0.0
    %1917 = vmatpush1.msra.mxu0 0.0
    %1918 = vmatprep.subr.mxu0 0.0
    %1919 = vmatpush1.msra.mxu0 0.0
    %1920 = vmatprep.subr.mxu0 0.0
    %1921 = vmatpush1.msra.mxu0 0.0
    %1922 = vmatprep.subr.mxu0 0.0
    %1923 = vmatpush1.msra.mxu0 0.0
    %1924 = vmatprep.subr.mxu0 0.0
    %1925 = vmatpush1.msra.mxu0 0.0
    %1926 = vmatprep.subr.mxu0 0.0
    %1927 = vmatpush1.msra.mxu0 0.0
    %1928 = vmatprep.subr.mxu0 0.0
    %1929 = vmatpush1.msra.mxu0 0.0
    %1930 = vmatprep.subr.mxu0 0.0
    %1931 = vmatpush1.msra.mxu0 0.0
    %1932 = vmatprep.subr.mxu0 0.0
    %1933 = vmatpush1.msra.mxu0 0.0
    %1934 = vmatprep.subr.mxu0 0.0
    %1935 = vmatpush1.msra.mxu0 0.0
    %1936 = vmatprep.subr.mxu0 %v1748
    %1937 = vmatpush1.msra.mxu0 %v1747
    %1938 = vmatprep.subr.mxu0 %v1746
    %1939 = vmatpush1.msra.mxu0 %v1745
    %1940 = vmatprep.subr.mxu0 %v1744
    %1941 = vmatpush1.msra.mxu0 %v1743
    %1942 = vmatprep.subr.mxu0 %v1742
    %1943 = vmatpush1.msra.mxu0 %v1741
    %1944 = vmatprep.subr.mxu0 0.0
    %1945 = vmatpush2.msra.mxu0 0.0
    %1946 = vmatprep.subr.mxu0 0.0
    %1947 = vmatpush2.msra.mxu0 0.0
    %1948 = vmatprep.subr.mxu0 0.0
    %1949 = vmatpush2.msra.mxu0 0.0
    %1950 = vmatprep.subr.mxu0 0.0
    %1951 = vmatpush2.msra.mxu0 0.0
    %1952 = vmatprep.subr.mxu0 0.0
    %1953 = vmatpush2.msra.mxu0 0.0
    %1954 = vmatprep.subr.mxu0 0.0
    %1955 = vmatpush2.msra.mxu0 0.0
    %1956 = vmatprep.subr.mxu0 0.0
    %1957 = vmatpush2.msra.mxu0 0.0
    %1958 = vmatprep.subr.mxu0 0.0
    %1959 = vmatpush2.msra.mxu0 0.0
    %1960 = vmatprep.subr.mxu0 0.0
    %1961 = vmatpush2.msra.mxu0 0.0
    %1962 = vmatprep.subr.mxu0 0.0
    %1963 = vmatpush2.msra.mxu0 0.0
    %1964 = vmatprep.subr.mxu0 0.0
    %1965 = vmatpush2.msra.mxu0 0.0
    %1966 = vmatprep.subr.mxu0 0.0
    %1967 = vmatpush2.msra.mxu0 0.0
    %1968 = vmatprep.subr.mxu0 0.0
    %1969 = vmatpush2.msra.mxu0 0.0
    %1970 = vmatprep.subr.mxu0 0.0
    %1971 = vmatpush2.msra.mxu0 0.0
    %1972 = vmatprep.subr.mxu0 0.0
    %1973 = vmatpush2.msra.mxu0 0.0
    %1974 = vmatprep.subr.mxu0 0.0
    %1975 = vmatpush2.msra.mxu0 0.0
    %1976 = vmatprep.mubr.f32.mxu0 0.0
    %1977 = vmatmul.mubr.f32.gmra.mxu0 %v1780
    %v1978 = vpop.f32.mrf.mxu0
    %v1979 = vadd.f32 %v1762, %v1978
    %v1980 = vpop.f32.mrf.mxu0
    %v1981 = vadd.f32 %v1762, %v1980
    %1982 = vmatprep.mubr.f32.mxu0 0.0
    %1983 = vmatmul.mubr.f32.gmra.mxu0 %v1783
    %v1984 = vpop.f32.mrf.mxu0
    %v1985 = vadd.f32 %v1767, %v1984
    %v1986 = vpop.f32.mrf.mxu0
    %v1987 = vadd.f32 %v1767, %v1986
    %1988 = vmatprep.mubr.f32.mxu0 0.0
    %1989 = vmatmul.mubr.f32.gmra.mxu0 %v1786
    %v1990 = vpop.f32.mrf.mxu0
    %v1991 = vadd.f32 %v1772, %v1990
    %v1992 = vpop.f32.mrf.mxu0
    %v1993 = vadd.f32 %v1772, %v1992
    %1994 = vmatprep.mubr.f32.mxu0 0.0
    %1995 = vmatmul.mubr.f32.gmra.mxu0 %v1789
    %v1996 = vpop.f32.mrf.mxu0
    %v1997 = vadd.f32 %v1777, %v1996
    %v1998 = vpop.f32.mrf.mxu0
    %v1999 = vadd.f32 %v1777, %v1998
    %2000 = vdwg.mxu0
    %v2001 = vmul.f32 %v1979, 0.5
    %v2002 = vmul.f32 %v1981, 0.5
    %v2003 = vmul.f32 %v1985, 0.5
    %v2004 = vmul.f32 %v1987, 0.5
    %v2005 = vmul.f32 %v1991, 0.5
    %v2006 = vmul.f32 %v1993, 0.5
    %v2007 = vmul.f32 %v1997, 0.5
    %v2008 = vmul.f32 %v1999, 0.5
    %v2009 = vtanh.pop %v2001
    %v2010 = vtanh.pop %v2002
    %v2011 = vtanh.pop %v2003
    %v2012 = vtanh.pop %v2004
    %v2013 = vtanh.pop %v2005
    %v2014 = vtanh.pop %v2006
    %v2015 = vtanh.pop %v2007
    %v2016 = vtanh.pop %v2008
    %v2017 = vmul.f32 %v2009, 0.5
    %v2018 = vmul.f32 %v2010, 0.5
    %v2019 = vmul.f32 %v2011, 0.5
    %v2020 = vmul.f32 %v2012, 0.5
    %v2021 = vmul.f32 %v2013, 0.5
    %v2022 = vmul.f32 %v2014, 0.5
    %v2023 = vmul.f32 %v2015, 0.5
    %v2024 = vmul.f32 %v2016, 0.5
    %v2025 = vadd.f32 %v2017, 0.5
    %v2026 = vadd.f32 %v2018, 0.5
    %v2027 = vadd.f32 %v2019, 0.5
    %v2028 = vadd.f32 %v2020, 0.5
    %v2029 = vadd.f32 %v2021, 0.5
    %v2030 = vadd.f32 %v2022, 0.5
    %v2031 = vadd.f32 %v2023, 0.5
    %v2032 = vadd.f32 %v2024, 0.5
    %s2033 = scalar_lea.vmem %s1, 224
    %v2034 = vld [vmem:[%s2033] sm:$0xff]
    %v2035 = vld [vmem:[%s2033 + $0x8] sm:$0xff]
    %v2036 = vld [vmem:[%s2033 + $0x10] sm:$0xff]
    %v2037 = vld [vmem:[%s2033 + $0x18] sm:$0xff]
    %s2038 = scalar_lea.vmem %s2, 224
    %v2039 = vld [vmem:[%s2038] sm:$0xff]
    %v2040 = vld [vmem:[%s2038 + $0x8] sm:$0xff]
    %v2041 = vld [vmem:[%s2038 + $0x10] sm:$0xff]
    %v2042 = vld [vmem:[%s2038 + $0x18] sm:$0xff]
    %2044 = vset.pattern.permute.xlu0 0
    %2045 = vperm.xlu0 %2044, %v2039
    %v2046 = vpop.permute.xlu0 %2045
    %2049 = vset.pattern.permute.xlu0 0
    %2050 = vperm.xlu0 %2049, %v2040
    %v2051 = vpop.permute.xlu0 %2050
    %2054 = vset.pattern.permute.xlu0 0
    %2055 = vperm.xlu0 %2054, %v2041
    %v2056 = vpop.permute.xlu0 %2055
    %2058 = vset.pattern.permute.xlu0 0
    %2059 = vperm.xlu0 %2058, %v2042
    %v2060 = vpop.permute.xlu0 %2059
    %v2062 = vsel %vm74, %v2034, 0
    %v2065 = vsel %vm74, %v2035, 0
    %v2068 = vsel %vm74, %v2036, 0
    %v2071 = vsel %vm74, %v2037, 0
    %2073 = vmatprep.subr.mxu0 0.0
    %2074 = vmatpush1.msra.mxu0 0.0
    %2075 = vmatprep.subr.mxu0 0.0
    %2076 = vmatpush1.msra.mxu0 0.0
    %2077 = vmatprep.subr.mxu0 0.0
    %2078 = vmatpush1.msra.mxu0 0.0
    %2079 = vmatprep.subr.mxu0 0.0
    %2080 = vmatpush1.msra.mxu0 0.0
    %2081 = vmatprep.subr.mxu0 0.0
    %2082 = vmatpush1.msra.mxu0 0.0
    %2083 = vmatprep.subr.mxu0 0.0
    %2084 = vmatpush1.msra.mxu0 0.0
    %2085 = vmatprep.subr.mxu0 0.0
    %2086 = vmatpush1.msra.mxu0 0.0
    %2087 = vmatprep.subr.mxu0 0.0
    %2088 = vmatpush1.msra.mxu0 0.0
    %2089 = vmatprep.subr.mxu0 0.0
    %2090 = vmatpush1.msra.mxu0 0.0
    %2091 = vmatprep.subr.mxu0 0.0
    %2092 = vmatpush1.msra.mxu0 0.0
    %2093 = vmatprep.subr.mxu0 0.0
    %2094 = vmatpush1.msra.mxu0 0.0
    %2095 = vmatprep.subr.mxu0 0.0
    %2096 = vmatpush1.msra.mxu0 0.0
    %2097 = vmatprep.subr.mxu0 %v1911
    %2098 = vmatpush1.msra.mxu0 %v1910
    %2099 = vmatprep.subr.mxu0 %v1909
    %2100 = vmatpush1.msra.mxu0 %v1908
    %2101 = vmatprep.subr.mxu0 %v1907
    %2102 = vmatpush1.msra.mxu0 %v1906
    %2103 = vmatprep.subr.mxu0 %v1905
    %2104 = vmatpush1.msra.mxu0 %v1904
    %2105 = vmatprep.subr.mxu0 0.0
    %2106 = vmatpush2.msra.mxu0 0.0
    %2107 = vmatprep.subr.mxu0 0.0
    %2108 = vmatpush2.msra.mxu0 0.0
    %2109 = vmatprep.subr.mxu0 0.0
    %2110 = vmatpush2.msra.mxu0 0.0
    %2111 = vmatprep.subr.mxu0 0.0
    %2112 = vmatpush2.msra.mxu0 0.0
    %2113 = vmatprep.subr.mxu0 0.0
    %2114 = vmatpush2.msra.mxu0 0.0
    %2115 = vmatprep.subr.mxu0 0.0
    %2116 = vmatpush2.msra.mxu0 0.0
    %2117 = vmatprep.subr.mxu0 0.0
    %2118 = vmatpush2.msra.mxu0 0.0
    %2119 = vmatprep.subr.mxu0 0.0
    %2120 = vmatpush2.msra.mxu0 0.0
    %2121 = vmatprep.subr.mxu0 0.0
    %2122 = vmatpush2.msra.mxu0 0.0
    %2123 = vmatprep.subr.mxu0 0.0
    %2124 = vmatpush2.msra.mxu0 0.0
    %2125 = vmatprep.subr.mxu0 0.0
    %2126 = vmatpush2.msra.mxu0 0.0
    %2127 = vmatprep.subr.mxu0 0.0
    %2128 = vmatpush2.msra.mxu0 0.0
    %2129 = vmatprep.subr.mxu0 0.0
    %2130 = vmatpush2.msra.mxu0 0.0
    %2131 = vmatprep.subr.mxu0 0.0
    %2132 = vmatpush2.msra.mxu0 0.0
    %2133 = vmatprep.subr.mxu0 0.0
    %2134 = vmatpush2.msra.mxu0 0.0
    %2135 = vmatprep.subr.mxu0 0.0
    %2136 = vmatpush2.msra.mxu0 0.0
    %2137 = vmatprep.mubr.f32.mxu0 0.0
    %2138 = vmatmul.mubr.f32.gmra.mxu0 %v2062
    %v2139 = vpop.f32.mrf.mxu0
    %v2140 = vadd.f32 %v2046, %v2139
    %v2141 = vpop.f32.mrf.mxu0
    %v2142 = vadd.f32 %v2046, %v2141
    %2143 = vmatprep.mubr.f32.mxu0 0.0
    %2144 = vmatmul.mubr.f32.gmra.mxu0 %v2065
    %v2145 = vpop.f32.mrf.mxu0
    %v2146 = vadd.f32 %v2051, %v2145
    %v2147 = vpop.f32.mrf.mxu0
    %v2148 = vadd.f32 %v2051, %v2147
    %2149 = vmatprep.mubr.f32.mxu0 0.0
    %2150 = vmatmul.mubr.f32.gmra.mxu0 %v2068
    %v2151 = vpop.f32.mrf.mxu0
    %v2152 = vpop.f32.mrf.mxu0
    %2153 = vmatprep.mubr.f32.mxu0 0.0
    %2154 = vmatmul.mubr.f32.gmra.mxu0 %v2071
    %v2155 = vpop.f32.mrf.mxu0
    %v2156 = vpop.f32.mrf.mxu0
    %2157 = vdwg.mxu0
    %v2158 = vmul.f32 %v2140, 0.5
    %v2159 = vmul.f32 %v2142, 0.5
    %v2160 = vmul.f32 %v2146, 0.5
    %v2161 = vmul.f32 %v2148, 0.5
    %v2162 = vtanh.pop %v2158
    %v2163 = vtanh.pop %v2159
    %v2164 = vtanh.pop %v2160
    %v2165 = vtanh.pop %v2161
    %v2166 = vmul.f32 %v2162, 0.5
    %v2167 = vmul.f32 %v2163, 0.5
    %v2168 = vmul.f32 %v2164, 0.5
    %v2169 = vmul.f32 %v2165, 0.5
    %v2170 = vadd.f32 %v2166, 0.5
    %v2171 = vadd.f32 %v2167, 0.5
    %v2172 = vadd.f32 %v2168, 0.5
    %v2173 = vadd.f32 %v2169, 0.5
    %2174 = vmatprep.subr.mxu0 0.0
    %2175 = vmatpush1.msra.mxu0 0.0
    %2176 = vmatprep.subr.mxu0 0.0
    %2177 = vmatpush1.msra.mxu0 0.0
    %2178 = vmatprep.subr.mxu0 0.0
    %2179 = vmatpush1.msra.mxu0 0.0
    %2180 = vmatprep.subr.mxu0 0.0
    %2181 = vmatpush1.msra.mxu0 0.0
    %2182 = vmatprep.subr.mxu0 0.0
    %2183 = vmatpush1.msra.mxu0 0.0
    %2184 = vmatprep.subr.mxu0 0.0
    %2185 = vmatpush1.msra.mxu0 0.0
    %2186 = vmatprep.subr.mxu0 0.0
    %2187 = vmatpush1.msra.mxu0 0.0
    %2188 = vmatprep.subr.mxu0 0.0
    %2189 = vmatpush1.msra.mxu0 0.0
    %2190 = vmatprep.subr.mxu0 0.0
    %2191 = vmatpush1.msra.mxu0 0.0
    %2192 = vmatprep.subr.mxu0 0.0
    %2193 = vmatpush1.msra.mxu0 0.0
    %2194 = vmatprep.subr.mxu0 0.0
    %2195 = vmatpush1.msra.mxu0 0.0
    %2196 = vmatprep.subr.mxu0 0.0
    %2197 = vmatpush1.msra.mxu0 0.0
    %2198 = vmatprep.subr.mxu0 %v2032
    %2199 = vmatpush1.msra.mxu0 %v2031
    %2200 = vmatprep.subr.mxu0 %v2030
    %2201 = vmatpush1.msra.mxu0 %v2029
    %2202 = vmatprep.subr.mxu0 %v2028
    %2203 = vmatpush1.msra.mxu0 %v2027
    %2204 = vmatprep.subr.mxu0 %v2026
    %2205 = vmatpush1.msra.mxu0 %v2025
    %2206 = vmatprep.subr.mxu0 0.0
    %2207 = vmatpush2.msra.mxu0 0.0
    %2208 = vmatprep.subr.mxu0 0.0
    %2209 = vmatpush2.msra.mxu0 0.0
    %2210 = vmatprep.subr.mxu0 0.0
    %2211 = vmatpush2.msra.mxu0 0.0
    %2212 = vmatprep.subr.mxu0 0.0
    %2213 = vmatpush2.msra.mxu0 0.0
    %2214 = vmatprep.subr.mxu0 0.0
    %2215 = vmatpush2.msra.mxu0 0.0
    %2216 = vmatprep.subr.mxu0 0.0
    %2217 = vmatpush2.msra.mxu0 0.0
    %2218 = vmatprep.subr.mxu0 0.0
    %2219 = vmatpush2.msra.mxu0 0.0
    %2220 = vmatprep.subr.mxu0 0.0
    %2221 = vmatpush2.msra.mxu0 0.0
    %2222 = vmatprep.subr.mxu0 0.0
    %2223 = vmatpush2.msra.mxu0 0.0
    %2224 = vmatprep.subr.mxu0 0.0
    %2225 = vmatpush2.msra.mxu0 0.0
    %2226 = vmatprep.subr.mxu0 0.0
    %2227 = vmatpush2.msra.mxu0 0.0
    %2228 = vmatprep.subr.mxu0 0.0
    %2229 = vmatpush2.msra.mxu0 0.0
    %2230 = vmatprep.subr.mxu0 0.0
    %2231 = vmatpush2.msra.mxu0 0.0
    %2232 = vmatprep.subr.mxu0 0.0
    %2233 = vmatpush2.msra.mxu0 0.0
    %2234 = vmatprep.subr.mxu0 0.0
    %2235 = vmatpush2.msra.mxu0 0.0
    %2236 = vmatprep.subr.mxu0 0.0
    %2237 = vmatpush2.msra.mxu0 0.0
    %2238 = vmatprep.mubr.f32.mxu0 0.0
    %2239 = vmatmul.mubr.f32.gmra.mxu0 %v2062
    %v2240 = vpop.f32.mrf.mxu0
    %v2241 = vadd.f32 %v2046, %v2240
    %v2242 = vpop.f32.mrf.mxu0
    %v2243 = vadd.f32 %v2046, %v2242
    %2244 = vmatprep.mubr.f32.mxu0 0.0
    %2245 = vmatmul.mubr.f32.gmra.mxu0 %v2065
    %v2246 = vpop.f32.mrf.mxu0
    %v2247 = vadd.f32 %v2051, %v2246
    %v2248 = vpop.f32.mrf.mxu0
    %v2249 = vadd.f32 %v2051, %v2248
    %2250 = vmatprep.mubr.f32.mxu0 0.0
    %2251 = vmatmul.mubr.f32.gmra.mxu0 %v2068
    %v2252 = vpop.f32.mrf.mxu0
    %v2253 = vpop.f32.mrf.mxu0
    %2254 = vmatprep.mubr.f32.mxu0 0.0
    %2255 = vmatmul.mubr.f32.gmra.mxu0 %v2071
    %v2256 = vpop.f32.mrf.mxu0
    %v2257 = vpop.f32.mrf.mxu0
    %2258 = vdwg.mxu0
    %v2259 = vmul.f32 %v2241, 0.5
    %v2260 = vmul.f32 %v2243, 0.5
    %v2261 = vmul.f32 %v2247, 0.5
    %v2262 = vmul.f32 %v2249, 0.5
    %v2263 = vtanh.pop %v2259
    %v2264 = vtanh.pop %v2260
    %v2265 = vtanh.pop %v2261
    %v2266 = vtanh.pop %v2262
    %v2267 = vmul.f32 %v2263, 0.5
    %v2268 = vmul.f32 %v2264, 0.5
    %v2269 = vmul.f32 %v2265, 0.5
    %v2270 = vmul.f32 %v2266, 0.5
    %v2271 = vadd.f32 %v2267, 0.5
    %v2272 = vadd.f32 %v2268, 0.5
    %v2273 = vadd.f32 %v2269, 0.5
    %v2274 = vadd.f32 %v2270, 0.5
    %2275 = vst [vmem:[#allocation5] sm:$0xff] %v2170
    %2276 = vst [vmem:[#allocation5 + $0x8] sm:$0xff] %v2171
    %2277 = vst [vmem:[#allocation5 + $0x10] sm:$0xff] %v2172
    %2278 = vst [vmem:[#allocation5 + $0x18] sm:$0xff] %v2173
    %s2279 = scalar_lea.vmem [#allocation5], 32
    %2280 = vst [vmem:[%s2279] sm:$0xff] %v2271
    %2281 = vst [vmem:[%s2279 + $0x8] sm:$0xff] %v2272
    %2282 = vst [vmem:[%s2279 + $0x10] sm:$0xff] %v2273
    %2283 = vst [vmem:[%s2279 + $0x18] sm:$0xff] %v2274
    // Predicated region
    $region18: #{tpu_custom_call.1} parent=1 // pred_check
      _
    $region19: #{tpu_custom_call.1} parent=1 // pred_check_branch
      %2285 = sbr.rel (0) target = $region21
    $region20: #{tpu_custom_call.1} parent=1 // pred_region
      %s2287 = ssub.s32 1024, 1024
      %2288 = vsyncadd [#allocation4], %s2287
      %s2289 = sshll.u32 [#allocation5], 4
      %s2290 = int_to_ptr.vmem [resolvable:$true] %s2289
      %2295 = dma.vmem_to_hbm [thread:$0]  %s2290, 1024, %s3, [#allocation4], 256, 256, 16
    $region21: #{tpu_custom_call.1} parent=1 // pred_fallthru
      _
    // Predicated region
    $region22: #{tpu_custom_call.1} parent=1 // pred_check
      _
    $region23: #{tpu_custom_call.1} parent=1 // pred_check_branch
      %2297 = sbr.rel (0) target = $region25
    $region24: #{tpu_custom_call.1} parent=1 // pred_region
      %2298 = dma.done [#allocation4], 1024
    $region25: #{tpu_custom_call.1} parent=1 // pred_fallthru
      _
    %2299 = vsyncpa [#allocation3], 1
    %2300 = vsyncpa [#allocation4], 1

</llo_original>
